<compile_context>
chip_gen: v5e
topology: v5e:2x2
jax: 0.10.0
libtpu: 0.0.40
codegen_flags: <defaults>
</compile_context>

<pallas_src>
import jax
import jax.numpy as jnp
from jax import lax
from jax.experimental import pallas as pl
from jax.experimental.pallas import tpu as pltpu


def interp_matrix(n_out: int, n_in: int) -> jnp.ndarray:
    """Row-stochastic bilinear interpolation matrix, align_corners=True
    (matches the module's F.interpolate(..., align_corners=True))."""
    o = jnp.arange(n_out, dtype=jnp.float32)
    if n_out > 1:
        src = o * (n_in - 1) / (n_out - 1)
    else:
        src = jnp.zeros_like(o)
    i0 = jnp.clip(jnp.floor(src), 0, n_in - 1).astype(jnp.int32)
    i1 = jnp.clip(i0 + 1, 0, n_in - 1)
    frac = src - i0.astype(jnp.float32)
    A = jnp.zeros((n_out, n_in), jnp.float32)
    A = A.at[jnp.arange(n_out), i0].add(1.0 - frac)
    A = A.at[jnp.arange(n_out), i1].add(frac)
    return A


def auxiliary_ps_forward(x_nchw, params, out_height, out_width,
                         *, operand_dtype=jnp.bfloat16):
    """Pallas implementation of AuxiliaryPSPlayers.forward (inference mode)."""
    N, Cin, H, W = x_nchw.shape
    Cmid = params["w1"].shape[-1]          # 256
    nc = params["w2"].shape[-1]            # n_classes
    HW = H * W
    Qout = out_height * out_width
    K = 9 * Cin                            # un-padded contraction dim

    # ---- activation prep: pad ONLY along H (2 rows), flatten (contiguous,
    #      free), left-pad by 1 so all nine 3x3 taps become forward slices,
    #      and lane-align the flat length.  ~5 KiB / batch element.
    flat_len = (H + 2) * W
    Lneed = HW + 2 * W + 2                 # max slice end over the 9 taps
    Lpad = ((Lneed + 127) // 128) * 128
    xp = jnp.pad(x_nchw, ((0, 0), (0, 0), (1, 1), (0, 0)))
    x_flat = xp.reshape(N, Cin, flat_len)
    x_flat = jnp.pad(x_flat, ((0, 0), (0, 0), (1, Lpad - flat_len - 1)))
    x_flat = x_flat.astype(operand_dtype)                       # (N, Cin, Lpad)

    # ---- edge masks for the dx=0 / dx=2 taps (zero where the 3x3 window
    #      hangs over the left / right image border).
    wcol = jnp.arange(HW, dtype=jnp.int32) % W
    masks = jnp.stack([wcol != 0, wcol != (W - 1)]).astype(operand_dtype)  # (2, HW)

    # ---- weights: fold the BN scale into the 3x3 conv weights (inference).
    w1t = params["w1"].reshape(K, Cmid).T * params["scale"].reshape(Cmid, 1)
    w1t = w1t.astype(operand_dtype)                              # (Cmid, K)
    b1 = params["bias"].reshape(Cmid, 1).astype(jnp.float32)     # folded BN bias
    w2t = params["w2"].T.astype(operand_dtype)                   # (nc, Cmid)
    b2 = params["b2"].reshape(nc, 1).astype(jnp.float32)

    # ---- bilinear upsample (align_corners=True) as one dense MXU operand.
    ah = interp_matrix(out_height, H)
    aw = interp_matrix(out_width, W)
    mt = jnp.kron(ah, aw).T.astype(operand_dtype)                # (HW, Qout)

    def kernel(x_ref, m_ref, w1t_ref, b1_ref, w2t_ref, b2_ref, mt_ref,
               o_ref, patch_ref):
        # x_ref   : (1, Cin, Lpad)  H-padded, flattened, left-shifted image
        # m_ref   : (2, HW)         left / right border masks
        # w1t_ref : (Cmid, K)       BN-scale-folded 3x3 weights (transposed)
        # b1_ref  : (Cmid, 1)       folded BN bias
        # w2t_ref : (nc, Cmid)      1x1 classifier weights (transposed)
        # b2_ref  : (nc, 1)         classifier bias
        # mt_ref  : (HW, Qout)      kron(A_h, A_w)^T
        # o_ref   : (1, nc, Qout)
        # patch_ref: VMEM scratch (K, HW) — in-kernel im2col tile
        xflat = x_ref[0]                                   # (Cin, Lpad)
        mask_l = m_ref[0:1, :]
        mask_r = m_ref[1:2, :]
        for dy in range(3):
            for dx in range(3):
                start = dy * W + dx                        # forward slice offset
                tap = xflat[:, start:start + HW]           # (Cin, HW)
                if dx == 0:
                    tap = tap * mask_l
                elif dx == 2:
                    tap = tap * mask_r
                t = dy * 3 + dx
                patch_ref[t * Cin:(t + 1) * Cin, :] = tap

        # 3x3 conv (BN scale already folded into w1t) + BN bias + ReLU.
        y = jnp.dot(w1t_ref[...], patch_ref[...],
                    preferred_element_type=jnp.float32)    # (Cmid, HW) f32
        y = jnp.maximum(y + b1_ref[...], 0.0)
        # Dropout2d(p=0.1) is identity at inference.

        # 1x1 classifier.
        logits = jnp.dot(w2t_ref[...], y.astype(w2t_ref.dtype),
                         preferred_element_type=jnp.float32) + b2_ref[...]  # (nc, HW)

        # Bilinear upsample as one matmul (mt columns sum to 1, so adding b2
        # before the upsample is exact).
        o_ref[0] = jnp.dot(logits.astype(mt_ref.dtype), mt_ref[...],
                           preferred_element_type=jnp.float32).astype(o_ref.dtype)

    out = pl.pallas_call(
        kernel,
        out_shape=jax.ShapeDtypeStruct((N, nc, Qout), jnp.float32),
        grid=(N,),
        in_specs=[
            pl.BlockSpec((1, Cin, Lpad), lambda n: (n, 0, 0)),
            pl.BlockSpec((2, HW), lambda n: (0, 0)),
            pl.BlockSpec((Cmid, K), lambda n: (0, 0)),
            pl.BlockSpec((Cmid, 1), lambda n: (0, 0)),
            pl.BlockSpec((nc, Cmid), lambda n: (0, 0)),
            pl.BlockSpec((nc, 1), lambda n: (0, 0)),
            pl.BlockSpec((HW, Qout), lambda n: (0, 0)),
        ],
        out_specs=pl.BlockSpec((1, nc, Qout), lambda n: (n, 0, 0)),
        scratch_shapes=[pltpu.VMEM((K, HW), operand_dtype)],
        compiler_params=pltpu.CompilerParams(dimension_semantics=("parallel",)),
    )(x_flat, masks, w1t, b1, w2t, b2, mt)

    # Contiguous (free) reshape to NCHW, matching the PyTorch module.
    return out.reshape(N, nc, out_height, out_width)


# ---------------------------------------------------------------------------
# Pure-JAX f32 reference (same math, via lax.conv / einsum) for validation.
# ---------------------------------------------------------------------------
def reference(x_nchw, params, out_height, out_width):
    H, W = x_nchw.shape[2], x_nchw.shape[3]
    x = jnp.transpose(x_nchw, (0, 2, 3, 1))
    y = lax.conv_general_dilated(x, params["w1"], window_strides=(1, 1),
                                 padding="SAME",
                                 dimension_numbers=("NHWC", "HWIO", "NHWC"))
    y = jnp.maximum(y * params["scale"] + params["bias"], 0.0)
    z = jnp.einsum("nhwc,ck->nhwk", y, params["w2"]) + params["b2"]
    ah = interp_matrix(out_height, H)
    aw = interp_matrix(out_width, W)
    z = jnp.einsum("Hh,nhwk->nHwk", ah, z)
    z = jnp.einsum("Ww,nhwk->nhWk", aw, z)
    return jnp.transpose(z, (0, 3, 1, 2))


if __name__ == "__main__":
    # Small shapes consistent with the module's forward.
    N, Cin, Hin, Win = 2, 4, 16, 16
    n_classes = 8
    out_height, out_width = 32, 32        # F.interpolate target (self.height, self.width)
    Cmid = 256
    eps = 1e-5                            # BatchNorm2d default eps

    key = jax.random.PRNGKey(0)
    ks = jax.random.split(key, 8)
    w1 = 0.1 * jax.random.normal(ks[0], (3, 3, Cin, Cmid), jnp.float32)   # HWIO
    gamma = 1.0 + 0.1 * jax.random.normal(ks[1], (Cmid,), jnp.float32)
    beta = 0.1 * jax.random.normal(ks[2], (Cmid,), jnp.float32)
    rmean = 0.1 * jax.random.normal(ks[3], (Cmid,), jnp.float32)
    rvar = jax.random.uniform(ks[4], (Cmid,), jnp.float32, 0.5, 1.5)
    scale = gamma / jnp.sqrt(rvar + eps)          # folded BN (inference)
    bias = beta - rmean * scale
    w2 = 0.1 * jax.random.normal(ks[5], (Cmid, n_classes), jnp.float32)
    b2 = 0.1 * jax.random.normal(ks[6], (n_classes,), jnp.float32)
    x = jax.random.normal(ks[7], (N, Cin, Hin, Win), jnp.float32)

    params = {"w1": w1, "scale": scale, "bias": bias, "w2": w2, "b2": b2}

    out = auxiliary_ps_forward(x, params, out_height, out_width)
    out = jax.block_until_ready(out)

    ref = jax.block_until_ready(reference(x, params, out_height, out_width))
    assert out.shape == (N, n_classes, out_height, out_width), out.shape
    # bf16 MXU operands with f32 accumulation -> compare vs f32 reference at a
    # bf16-appropriate tolerance.
    assert jnp.allclose(out, ref, atol=3e-2, rtol=3e-2), float(jnp.max(jnp.abs(out - ref)))

    print("KERNEL_OK")
</pallas_src>

<mosaic_0001>
module attributes {stable_mosaic.version = 11 : i64} {
  func.func @kernel(%arg0: i32, %arg1: memref<1x4x384xbf16, #tpu.memory_space<vmem>>, %arg2: memref<2x256xbf16, #tpu.memory_space<vmem>>, %arg3: memref<256x36xbf16, #tpu.memory_space<vmem>>, %arg4: memref<256x1xf32, #tpu.memory_space<vmem>>, %arg5: memref<8x256xbf16, #tpu.memory_space<vmem>>, %arg6: memref<8x1xf32, #tpu.memory_space<vmem>>, %arg7: memref<256x1024xbf16, #tpu.memory_space<vmem>>, %arg8: memref<1x8x1024xf32, #tpu.memory_space<vmem>>, %arg9: memref<36x256xbf16, #tpu.memory_space<vmem>>) attributes {dimension_semantics = [#tpu.dimension_semantics<parallel>], iteration_bounds = array<i64: 2>, scalar_prefetch = 0 : i64, scratch_operands = 1 : i64, tpu.core_type = #tpu.core_type<tc>, window_params = [{transform_indices = @transform_0, window_bounds = array<i64: 1, 4, 384>}, {pipeline_mode = #tpu.pipeline_mode<synchronous>, transform_indices = @transform_1, window_bounds = array<i64: 2, 256>}, {pipeline_mode = #tpu.pipeline_mode<synchronous>, transform_indices = @transform_2, window_bounds = array<i64: 256, 36>}, {pipeline_mode = #tpu.pipeline_mode<synchronous>, transform_indices = @transform_3, window_bounds = array<i64: 256, 1>}, {pipeline_mode = #tpu.pipeline_mode<synchronous>, transform_indices = @transform_4, window_bounds = array<i64: 8, 256>}, {pipeline_mode = #tpu.pipeline_mode<synchronous>, transform_indices = @transform_5, window_bounds = array<i64: 8, 1>}, {pipeline_mode = #tpu.pipeline_mode<synchronous>, transform_indices = @transform_6, window_bounds = array<i64: 256, 1024>}, {transform_indices = @transform_7, window_bounds = array<i64: 1, 8, 1024>}]} {
    %c0 = arith.constant 0 : index
    %c0_0 = arith.constant 0 : index
    %c0_1 = arith.constant 0 : index
    %0 = vector.load %arg1[%c0, %c0_0, %c0_1] : memref<1x4x384xbf16, #tpu.memory_space<vmem>>, vector<1x4x384xbf16>
    %1 = vector.shape_cast %0 : vector<1x4x384xbf16> to vector<4x384xbf16>
    %c0_2 = arith.constant 0 : index
    %c0_3 = arith.constant 0 : index
    %2 = vector.load %arg2[%c0_2, %c0_3] : memref<2x256xbf16, #tpu.memory_space<vmem>>, vector<1x256xbf16>
    %c1 = arith.constant 1 : index
    %c0_4 = arith.constant 0 : index
    %3 = vector.load %arg2[%c1, %c0_4] : memref<2x256xbf16, #tpu.memory_space<vmem>>, vector<1x256xbf16>
    %4 = vector.extract_strided_slice %1 {offsets = [0, 0], sizes = [4, 256], strides = [1, 1]} : vector<4x384xbf16> to vector<4x256xbf16>
    %5 = vector.broadcast %2 : vector<1x256xbf16> to vector<4x256xbf16>
    %6 = arith.mulf %4, %5 : vector<4x256xbf16>
    %c0_5 = arith.constant 0 : index
    %c0_6 = arith.constant 0 : index
    %7 = vector.load %arg9[%c0_5, %c0_6] : memref<36x256xbf16, #tpu.memory_space<vmem>>, vector<4x256xbf16>
    tpu.vector_store %arg9[%c0_5, %c0_6], %6 {strides = array<i32>} : memref<36x256xbf16, #tpu.memory_space<vmem>>, vector<4x256xbf16>,
    %8 = vector.extract_strided_slice %1 {offsets = [0, 1], sizes = [4, 256], strides = [1, 1]} : vector<4x384xbf16> to vector<4x256xbf16>
    %c4 = arith.constant 4 : index
    %c0_7 = arith.constant 0 : index
    %9 = vector.load %arg9[%c4, %c0_7] : memref<36x256xbf16, #tpu.memory_space<vmem>>, vector<4x256xbf16>
    tpu.vector_store %arg9[%c4, %c0_7], %8 {strides = array<i32>} : memref<36x256xbf16, #tpu.memory_space<vmem>>, vector<4x256xbf16>,
    %10 = vector.extract_strided_slice %1 {offsets = [0, 2], sizes = [4, 256], strides = [1, 1]} : vector<4x384xbf16> to vector<4x256xbf16>
    %11 = vector.broadcast %3 : vector<1x256xbf16> to vector<4x256xbf16>
    %12 = arith.mulf %10, %11 : vector<4x256xbf16>
    %c8 = arith.constant 8 : index
    %c0_8 = arith.constant 0 : index
    %13 = vector.load %arg9[%c8, %c0_8] : memref<36x256xbf16, #tpu.memory_space<vmem>>, vector<4x256xbf16>
    tpu.vector_store %arg9[%c8, %c0_8], %12 {strides = array<i32>} : memref<36x256xbf16, #tpu.memory_space<vmem>>, vector<4x256xbf16>,
    %14 = vector.extract_strided_slice %1 {offsets = [0, 16], sizes = [4, 256], strides = [1, 1]} : vector<4x384xbf16> to vector<4x256xbf16>
    %15 = vector.broadcast %2 : vector<1x256xbf16> to vector<4x256xbf16>
    %16 = arith.mulf %14, %15 : vector<4x256xbf16>
    %c12 = arith.constant 12 : index
    %c0_9 = arith.constant 0 : index
    %17 = vector.load %arg9[%c12, %c0_9] : memref<36x256xbf16, #tpu.memory_space<vmem>>, vector<4x256xbf16>
    tpu.vector_store %arg9[%c12, %c0_9], %16 {strides = array<i32>} : memref<36x256xbf16, #tpu.memory_space<vmem>>, vector<4x256xbf16>,
    %18 = vector.extract_strided_slice %1 {offsets = [0, 17], sizes = [4, 256], strides = [1, 1]} : vector<4x384xbf16> to vector<4x256xbf16>
    %c16 = arith.constant 16 : index
    %c0_10 = arith.constant 0 : index
    %19 = vector.load %arg9[%c16, %c0_10] : memref<36x256xbf16, #tpu.memory_space<vmem>>, vector<4x256xbf16>
    tpu.vector_store %arg9[%c16, %c0_10], %18 {strides = array<i32>} : memref<36x256xbf16, #tpu.memory_space<vmem>>, vector<4x256xbf16>,
    %20 = vector.extract_strided_slice %1 {offsets = [0, 18], sizes = [4, 256], strides = [1, 1]} : vector<4x384xbf16> to vector<4x256xbf16>
    %21 = vector.broadcast %3 : vector<1x256xbf16> to vector<4x256xbf16>
    %22 = arith.mulf %20, %21 : vector<4x256xbf16>
    %c20 = arith.constant 20 : index
    %c0_11 = arith.constant 0 : index
    %23 = vector.load %arg9[%c20, %c0_11] : memref<36x256xbf16, #tpu.memory_space<vmem>>, vector<4x256xbf16>
    tpu.vector_store %arg9[%c20, %c0_11], %22 {strides = array<i32>} : memref<36x256xbf16, #tpu.memory_space<vmem>>, vector<4x256xbf16>,
    %24 = vector.extract_strided_slice %1 {offsets = [0, 32], sizes = [4, 256], strides = [1, 1]} : vector<4x384xbf16> to vector<4x256xbf16>
    %25 = vector.broadcast %2 : vector<1x256xbf16> to vector<4x256xbf16>
    %26 = arith.mulf %24, %25 : vector<4x256xbf16>
    %c24 = arith.constant 24 : index
    %c0_12 = arith.constant 0 : index
    %27 = vector.load %arg9[%c24, %c0_12] : memref<36x256xbf16, #tpu.memory_space<vmem>>, vector<4x256xbf16>
    tpu.vector_store %arg9[%c24, %c0_12], %26 {strides = array<i32>} : memref<36x256xbf16, #tpu.memory_space<vmem>>, vector<4x256xbf16>,
    %28 = vector.extract_strided_slice %1 {offsets = [0, 33], sizes = [4, 256], strides = [1, 1]} : vector<4x384xbf16> to vector<4x256xbf16>
    %c28 = arith.constant 28 : index
    %c0_13 = arith.constant 0 : index
    %29 = vector.load %arg9[%c28, %c0_13] : memref<36x256xbf16, #tpu.memory_space<vmem>>, vector<4x256xbf16>
    tpu.vector_store %arg9[%c28, %c0_13], %28 {strides = array<i32>} : memref<36x256xbf16, #tpu.memory_space<vmem>>, vector<4x256xbf16>,
    %30 = vector.extract_strided_slice %1 {offsets = [0, 34], sizes = [4, 256], strides = [1, 1]} : vector<4x384xbf16> to vector<4x256xbf16>
    %31 = vector.broadcast %3 : vector<1x256xbf16> to vector<4x256xbf16>
    %32 = arith.mulf %30, %31 : vector<4x256xbf16>
    %c32 = arith.constant 32 : index
    %c0_14 = arith.constant 0 : index
    %33 = vector.load %arg9[%c32, %c0_14] : memref<36x256xbf16, #tpu.memory_space<vmem>>, vector<4x256xbf16>
    tpu.vector_store %arg9[%c32, %c0_14], %32 {strides = array<i32>} : memref<36x256xbf16, #tpu.memory_space<vmem>>, vector<4x256xbf16>,
    %c0_15 = arith.constant 0 : index
    %c0_16 = arith.constant 0 : index
    %34 = vector.load %arg3[%c0_15, %c0_16] : memref<256x36xbf16, #tpu.memory_space<vmem>>, vector<256x36xbf16>
    %c0_17 = arith.constant 0 : index
    %c0_18 = arith.constant 0 : index
    %35 = vector.load %arg9[%c0_17, %c0_18] : memref<36x256xbf16, #tpu.memory_space<vmem>>, vector<36x256xbf16>
    %cst = arith.constant dense<0.000000e+00> : vector<256x256xf32>
    %36 = tpu.matmul %34, %35, %cst {dimension_numbers = #tpu.dot_dimension_numbers<[1], [0], [0], [1], [0, 0, 1, 1], [], []>} : vector<256x36xbf16>, vector<36x256xbf16>, vector<256x256xf32> -> vector<256x256xf32>
    %c0_19 = arith.constant 0 : index
    %c0_20 = arith.constant 0 : index
    %37 = vector.load %arg4[%c0_19, %c0_20] : memref<256x1xf32, #tpu.memory_space<vmem>>, vector<256x1xf32>
    %38 = vector.broadcast %37 : vector<256x1xf32> to vector<256x256xf32>
    %39 = arith.addf %36, %38 : vector<256x256xf32>
    %cst_21 = arith.constant 0.000000e+00 : f32
    %40 = vector.broadcast %cst_21 : f32 to vector<256x256xf32>
    %41 = arith.maximumf %39, %40 : vector<256x256xf32>
    %c0_22 = arith.constant 0 : index
    %c0_23 = arith.constant 0 : index
    %42 = vector.load %arg5[%c0_22, %c0_23] : memref<8x256xbf16, #tpu.memory_space<vmem>>, vector<8x256xbf16>
    %43 = arith.truncf %41 : vector<256x256xf32> to vector<256x256xbf16>
    %cst_24 = arith.constant dense<0.000000e+00> : vector<8x256xf32>
    %44 = tpu.matmul %42, %43, %cst_24 {dimension_numbers = #tpu.dot_dimension_numbers<[1], [0], [0], [1], [0, 0, 1, 1], [], []>} : vector<8x256xbf16>, vector<256x256xbf16>, vector<8x256xf32> -> vector<8x256xf32>
    %c0_25 = arith.constant 0 : index
    %c0_26 = arith.constant 0 : index
    %45 = vector.load %arg6[%c0_25, %c0_26] : memref<8x1xf32, #tpu.memory_space<vmem>>, vector<8x1xf32>
    %46 = vector.broadcast %45 : vector<8x1xf32> to vector<8x256xf32>
    %47 = arith.addf %44, %46 : vector<8x256xf32>
    %48 = arith.truncf %47 : vector<8x256xf32> to vector<8x256xbf16>
    %c0_27 = arith.constant 0 : index
    %c0_28 = arith.constant 0 : index
    %49 = vector.load %arg7[%c0_27, %c0_28] : memref<256x1024xbf16, #tpu.memory_space<vmem>>, vector<256x1024xbf16>
    %cst_29 = arith.constant dense<0.000000e+00> : vector<8x1024xf32>
    %50 = tpu.matmul %48, %49, %cst_29 {dimension_numbers = #tpu.dot_dimension_numbers<[1], [0], [0], [1], [0, 0, 1, 1], [], []>} : vector<8x256xbf16>, vector<256x1024xbf16>, vector<8x1024xf32> -> vector<8x1024xf32>
    %c0_30 = arith.constant 0 : index
    %c0_31 = arith.constant 0 : index
    %c0_32 = arith.constant 0 : index
    %51 = vector.load %arg8[%c0_30, %c0_31, %c0_32] : memref<1x8x1024xf32, #tpu.memory_space<vmem>>, vector<1x8x1024xf32>
    %52 = vector.shape_cast %51 : vector<1x8x1024xf32> to vector<8x1024xf32>
    %53 = vector.shape_cast %50 : vector<8x1024xf32> to vector<1x8x1024xf32>
    tpu.vector_store %arg8[%c0_30, %c0_31, %c0_32], %53 {strides = array<i32>} : memref<1x8x1024xf32, #tpu.memory_space<vmem>>, vector<1x8x1024xf32>,
    return
  }
  func.func @transform_0(%arg0: i32) -> (i32, i32, i32) {
    %c0_i32 = arith.constant 0 : i32
    %c0_i32_0 = arith.constant 0 : i32
    %c0_i32_1 = arith.constant 0 : i32
    return %arg0, %c0_i32, %c0_i32_0 : i32, i32, i32
  }
  func.func @transform_1(%arg0: i32) -> (i32, i32) {
    %c0_i32 = arith.constant 0 : i32
    %c0_i32_0 = arith.constant 0 : i32
    %c0_i32_1 = arith.constant 0 : i32
    return %c0_i32, %c0_i32_0 : i32, i32
  }
  func.func @transform_2(%arg0: i32) -> (i32, i32) {
    %c0_i32 = arith.constant 0 : i32
    %c0_i32_0 = arith.constant 0 : i32
    %c0_i32_1 = arith.constant 0 : i32
    return %c0_i32, %c0_i32_0 : i32, i32
  }
  func.func @transform_3(%arg0: i32) -> (i32, i32) {
    %c0_i32 = arith.constant 0 : i32
    %c0_i32_0 = arith.constant 0 : i32
    %c0_i32_1 = arith.constant 0 : i32
    return %c0_i32, %c0_i32_0 : i32, i32
  }
  func.func @transform_4(%arg0: i32) -> (i32, i32) {
    %c0_i32 = arith.constant 0 : i32
    %c0_i32_0 = arith.constant 0 : i32
    %c0_i32_1 = arith.constant 0 : i32
    return %c0_i32, %c0_i32_0 : i32, i32
  }
  func.func @transform_5(%arg0: i32) -> (i32, i32) {
    %c0_i32 = arith.constant 0 : i32
    %c0_i32_0 = arith.constant 0 : i32
    %c0_i32_1 = arith.constant 0 : i32
    return %c0_i32, %c0_i32_0 : i32, i32
  }
  func.func @transform_6(%arg0: i32) -> (i32, i32) {
    %c0_i32 = arith.constant 0 : i32
    %c0_i32_0 = arith.constant 0 : i32
    %c0_i32_1 = arith.constant 0 : i32
    return %c0_i32, %c0_i32_0 : i32, i32
  }
  func.func @transform_7(%arg0: i32) -> (i32, i32, i32) {
    %c0_i32 = arith.constant 0 : i32
    %c0_i32_0 = arith.constant 0 : i32
    %c0_i32_1 = arith.constant 0 : i32
    return %arg0, %c0_i32, %c0_i32_0 : i32, i32, i32
  }
}

</mosaic_0001>

<llo_original>
// kernel: tpu_custom_call.1
$region0: #{tpu_custom_call.1}
  #allocation0 [shape = 'u32[]', space=smem, size = 0x4, offset = 0x4, fixed_abs, tag = 'smem constant byte address 0x4 - core index']
  #allocation1 [shape = 'u32[72,128]{1,0:T(1,128)}', space=vmem, size = 0x9000, scoped, tag = 'internal scratch']
  #allocation2 [shape = 'bf16[36,256]{1,0:T(8,128)(2,1)}', space=vmem, size = 0x5000, scoped, tag = 'scratch operand']
  %s0 = inlined_call_operand.vmem [shape: bf16[2,4,384], index: 0, kind: input, shape index: {}]
  %s1 = inlined_call_operand.vmem [shape: bf16[2,256], index: 1, kind: input, shape index: {}]
  %s2 = inlined_call_operand.vmem [shape: bf16[256,36], index: 2, kind: input, shape index: {}]
  %s3 = inlined_call_operand.vmem [shape: f32[256,1], index: 3, kind: input, shape index: {}]
  %s4 = inlined_call_operand.vmem [shape: bf16[8,256], index: 4, kind: input, shape index: {}]
  %s5 = inlined_call_operand.vmem [shape: f32[8,1], index: 5, kind: input, shape index: {}]
  %s6 = inlined_call_operand.hbm [shape: bf16[256,1024], index: 6, kind: input, shape index: {}]
  %s7 = inlined_call_operand.hbm [shape: f32[2,8,1024], index: 7, kind: output, shape index: {}]
  %s8 = sld [smem:[#allocation0]]
  $region65: #{tpu_custom_call.1} parent=0
    _
  %s10 = ssub.s32 1, %s8
  %s11 = scalar_select 0, %s10, %s8
  $region1: #{tpu_custom_call.1} parent=0
    #allocation3 [shape = 'u8[524288]{0}', space=vmem, size = 0x80000, scoped, tag = 'input window, operand 6, single buffered']
    #allocation4 [shape = 's32[2]{0}', space=sflag, size = 0x8, scoped, tag = 'scoped memory for tpu_custom_call.1']
    #allocation5 [shape = 's32[2]{0}', space=sflag, size = 0x8, scoped, tag = 'scoped memory for tpu_custom_call.1']
    #allocation6 [shape = 'u8[65536]{0}', space=vmem, size = 0x10000, scoped, tag = 'output window, operand 0']
    %12 = vsyncpa [#allocation4], 0
    %13 = vsyncpa [#allocation5], 0
    %s14 = scalar_lea.sflag [#allocation5], 1
    %15 = vsyncpa %s14, 0
    loop: start=0, step=1, limit=4
    $region2: #{tpu_custom_call.1} parent=1 // loop_pre_header
      _
    $region3: #{tpu_custom_call.1} parent=1 // loop_header
      %s17 = sphi 0, %s21
      %p18 = scmp.ge.s32.totalorder %s17, 4
      %s27 = sphi 0, %s29
      %s30 = sphi 0, %s27
      %s31 = sphi 0, %s30
      %s47 = sphi 0, %s31
      %s51 = sphi 0, %s51
      %s53 = sphi 0, %s51
      %s54 = sphi 0, %s53
      %s68 = sphi 0, %s54
      %s72 = sphi 0, %s72
      %s74 = sphi 0, %s72
      %s75 = sphi 0, %s74
      %s89 = sphi 0, %s75
      %s93 = sphi 0, %s93
      %s95 = sphi 0, %s93
      %s96 = sphi 0, %s95
      %s110 = sphi 0, %s96
      %s114 = sphi 0, %s114
      %s116 = sphi 0, %s114
      %s117 = sphi 0, %s116
      %s131 = sphi 0, %s117
      %s135 = sphi 0, %s135
      %s137 = sphi 0, %s135
      %s138 = sphi 0, %s137
      %s152 = sphi 0, %s138
      %s156 = sphi 0, %s156
      %s158 = sphi 0, %s156
      %s159 = sphi 0, %s158
      %s173 = sphi 0, %s159
      %s179 = sphi 0, %s181
      %s182 = sphi 0, %s179
      %s183 = sphi 0, %s182
      %s199 = sphi 0, %s183
    $region4: #{tpu_custom_call.1} parent=1 // loop_header_branch
      %20 = sbr.rel (%p18) target = $region8
    $region5: #{tpu_custom_call.1} parent=1 // loop_body
      %s22 = ssub.s32 %s17, 1
      %s23 = ssub.s32 %s17, 2
      %s24 = sadd.s32 %s17, 1
      %s25 = ssub.s32 %s17, %s24
      %p26 = scmp.eq.s32.totalorder %s25, 0
      %s28 = sadd.s32 %s27, 1
      %s29 = scalar_select %p26, %s27, %s28
      %p32 = pneg %p26
      %p33 = scmp.eq.s32.totalorder %s17, 1
      %p34 = por %p32, %p33
      %p35 = scmp.ne.s32.totalorder %s27, %s30
      %p36 = scmp.eq.s32.totalorder %s17, 0
      %p37 = por %p35, %p36
      %p38 = scmp.ne.s32.totalorder %s27, %s30
      %p39 = scmp.eq.s32.totalorder %s22, 1
      %p40 = por %p38, %p39
      %p41 = scmp.ne.s32.totalorder %s30, %s31
      %p42 = scmp.eq.s32.totalorder %s22, 0
      %p43 = por %p41, %p42
      %p44 = scmp.ne.s32.totalorder %s30, %s31
      %p45 = scmp.eq.s32.totalorder %s23, 1
      %p46 = por %p44, %p45
      %p48 = scmp.ne.s32.totalorder %s31, %s47
      %p49 = scmp.eq.s32.totalorder %s23, 0
      %p50 = por %p48, %p49
      %s52 = sadd.s32 %s51, 1
      %p55 = scmp.eq.s32.totalorder %s17, 1
      %p56 = scmp.ne.s32.totalorder %s51, %s53
      %p57 = scmp.eq.s32.totalorder %s17, 0
      %p58 = por %p56, %p57
      %p59 = scmp.ne.s32.totalorder %s51, %s53
      %p60 = scmp.eq.s32.totalorder %s22, 1
      %p61 = por %p59, %p60
      %p62 = scmp.ne.s32.totalorder %s53, %s54
      %p63 = scmp.eq.s32.totalorder %s22, 0
      %p64 = por %p62, %p63
      %p65 = scmp.ne.s32.totalorder %s53, %s54
      %p66 = scmp.eq.s32.totalorder %s23, 1
      %p67 = por %p65, %p66
      %p69 = scmp.ne.s32.totalorder %s54, %s68
      %p70 = scmp.eq.s32.totalorder %s23, 0
      %p71 = por %p69, %p70
      %s73 = sadd.s32 %s72, 1
      %p76 = scmp.eq.s32.totalorder %s17, 1
      %p77 = scmp.ne.s32.totalorder %s72, %s74
      %p78 = scmp.eq.s32.totalorder %s17, 0
      %p79 = por %p77, %p78
      %p80 = scmp.ne.s32.totalorder %s72, %s74
      %p81 = scmp.eq.s32.totalorder %s22, 1
      %p82 = por %p80, %p81
      %p83 = scmp.ne.s32.totalorder %s74, %s75
      %p84 = scmp.eq.s32.totalorder %s22, 0
      %p85 = por %p83, %p84
      %p86 = scmp.ne.s32.totalorder %s74, %s75
      %p87 = scmp.eq.s32.totalorder %s23, 1
      %p88 = por %p86, %p87
      %p90 = scmp.ne.s32.totalorder %s75, %s89
      %p91 = scmp.eq.s32.totalorder %s23, 0
      %p92 = por %p90, %p91
      %s94 = sadd.s32 %s93, 1
      %p97 = scmp.eq.s32.totalorder %s17, 1
      %p98 = scmp.ne.s32.totalorder %s93, %s95
      %p99 = scmp.eq.s32.totalorder %s17, 0
      %p100 = por %p98, %p99
      %p101 = scmp.ne.s32.totalorder %s93, %s95
      %p102 = scmp.eq.s32.totalorder %s22, 1
      %p103 = por %p101, %p102
      %p104 = scmp.ne.s32.totalorder %s95, %s96
      %p105 = scmp.eq.s32.totalorder %s22, 0
      %p106 = por %p104, %p105
      %p107 = scmp.ne.s32.totalorder %s95, %s96
      %p108 = scmp.eq.s32.totalorder %s23, 1
      %p109 = por %p107, %p108
      %p111 = scmp.ne.s32.totalorder %s96, %s110
      %p112 = scmp.eq.s32.totalorder %s23, 0
      %p113 = por %p111, %p112
      %s115 = sadd.s32 %s114, 1
      %p118 = scmp.eq.s32.totalorder %s17, 1
      %p119 = scmp.ne.s32.totalorder %s114, %s116
      %p120 = scmp.eq.s32.totalorder %s17, 0
      %p121 = por %p119, %p120
      %p122 = scmp.ne.s32.totalorder %s114, %s116
      %p123 = scmp.eq.s32.totalorder %s22, 1
      %p124 = por %p122, %p123
      %p125 = scmp.ne.s32.totalorder %s116, %s117
      %p126 = scmp.eq.s32.totalorder %s22, 0
      %p127 = por %p125, %p126
      %p128 = scmp.ne.s32.totalorder %s116, %s117
      %p129 = scmp.eq.s32.totalorder %s23, 1
      %p130 = por %p128, %p129
      %p132 = scmp.ne.s32.totalorder %s117, %s131
      %p133 = scmp.eq.s32.totalorder %s23, 0
      %p134 = por %p132, %p133
      %s136 = sadd.s32 %s135, 1
      %p139 = scmp.eq.s32.totalorder %s17, 1
      %p140 = scmp.ne.s32.totalorder %s135, %s137
      %p141 = scmp.eq.s32.totalorder %s17, 0
      %p142 = por %p140, %p141
      %p143 = scmp.ne.s32.totalorder %s135, %s137
      %p144 = scmp.eq.s32.totalorder %s22, 1
      %p145 = por %p143, %p144
      %p146 = scmp.ne.s32.totalorder %s137, %s138
      %p147 = scmp.eq.s32.totalorder %s22, 0
      %p148 = por %p146, %p147
      %p149 = scmp.ne.s32.totalorder %s137, %s138
      %p150 = scmp.eq.s32.totalorder %s23, 1
      %p151 = por %p149, %p150
      %p153 = scmp.ne.s32.totalorder %s138, %s152
      %p154 = scmp.eq.s32.totalorder %s23, 0
      %p155 = por %p153, %p154
      %s157 = sadd.s32 %s156, 1
      %p160 = scmp.eq.s32.totalorder %s17, 1
      %p161 = scmp.ne.s32.totalorder %s156, %s158
      %p162 = scmp.eq.s32.totalorder %s17, 0
      %p163 = por %p161, %p162
      %p164 = scmp.ne.s32.totalorder %s156, %s158
      %p165 = scmp.eq.s32.totalorder %s22, 1
      %p166 = por %p164, %p165
      %p167 = scmp.ne.s32.totalorder %s158, %s159
      %p168 = scmp.eq.s32.totalorder %s22, 0
      %p169 = por %p167, %p168
      %p170 = scmp.ne.s32.totalorder %s158, %s159
      %p171 = scmp.eq.s32.totalorder %s23, 1
      %p172 = por %p170, %p171
      %p174 = scmp.ne.s32.totalorder %s159, %s173
      %p175 = scmp.eq.s32.totalorder %s23, 0
      %p176 = por %p174, %p175
      %s177 = ssub.s32 %s17, %s24
      %p178 = scmp.eq.s32.totalorder %s177, 0
      %s180 = sadd.s32 %s179, 1
      %s181 = scalar_select %p178, %s179, %s180
      %p184 = pneg %p178
      %p185 = scmp.eq.s32.totalorder %s17, 1
      %p186 = por %p184, %p185
      %p187 = scmp.ne.s32.totalorder %s179, %s182
      %p188 = scmp.eq.s32.totalorder %s17, 0
      %p189 = por %p187, %p188
      %p190 = scmp.ne.s32.totalorder %s179, %s182
      %p191 = scmp.eq.s32.totalorder %s22, 1
      %p192 = por %p190, %p191
      %p193 = scmp.ne.s32.totalorder %s182, %s183
      %p194 = scmp.eq.s32.totalorder %s22, 0
      %p195 = por %p193, %p194
      %p196 = scmp.ne.s32.totalorder %s182, %s183
      %p197 = scmp.eq.s32.totalorder %s23, 1
      %p198 = por %p196, %p197
      %p200 = scmp.ne.s32.totalorder %s183, %s199
      %p201 = scmp.eq.s32.totalorder %s23, 0
      %p202 = por %p200, %p201
      %p203 = scmp.le.s32.totalorder 1, %s17
      %p204 = scmp.lt.s32.totalorder %s17, 3
      %p205 = pnand %p203, %p204
      %p206 = pneg %p205
      // Predicated region
      $region9: #{tpu_custom_call.1} parent=5 // pred_check
        _
      $region10: #{tpu_custom_call.1} parent=5 // pred_check_branch
        %208 = sbr.rel (%p205) target = $region12
      $region11: #{tpu_custom_call.1} parent=5 // pred_region
        %s209 = ssub.s32 %s17, 1
        // Predicated region
        $region13: #{tpu_custom_call.1} parent=11 // pred_check
          %p210 = pneg %p64
        $region14: #{tpu_custom_call.1} parent=11 // pred_check_branch
          %212 = sbr.rel (%p210) target = $region16
        $region15: #{tpu_custom_call.1} parent=11 // pred_region
          _
        $region16: #{tpu_custom_call.1} parent=11 // pred_fallthru
          _
        // Predicated region
        $region17: #{tpu_custom_call.1} parent=11 // pred_check
          %p213 = pneg %p85
        $region18: #{tpu_custom_call.1} parent=11 // pred_check_branch
          %215 = sbr.rel (%p213) target = $region20
        $region19: #{tpu_custom_call.1} parent=11 // pred_region
          _
        $region20: #{tpu_custom_call.1} parent=11 // pred_fallthru
          _
        // Predicated region
        $region21: #{tpu_custom_call.1} parent=11 // pred_check
          %p216 = pneg %p106
        $region22: #{tpu_custom_call.1} parent=11 // pred_check_branch
          %218 = sbr.rel (%p216) target = $region24
        $region23: #{tpu_custom_call.1} parent=11 // pred_region
          _
        $region24: #{tpu_custom_call.1} parent=11 // pred_fallthru
          _
        // Predicated region
        $region25: #{tpu_custom_call.1} parent=11 // pred_check
          %p219 = pneg %p127
        $region26: #{tpu_custom_call.1} parent=11 // pred_check_branch
          %221 = sbr.rel (%p219) target = $region28
        $region27: #{tpu_custom_call.1} parent=11 // pred_region
          _
        $region28: #{tpu_custom_call.1} parent=11 // pred_fallthru
          _
        // Predicated region
        $region29: #{tpu_custom_call.1} parent=11 // pred_check
          %p222 = pneg %p148
        $region30: #{tpu_custom_call.1} parent=11 // pred_check_branch
          %224 = sbr.rel (%p222) target = $region32
        $region31: #{tpu_custom_call.1} parent=11 // pred_region
          _
        $region32: #{tpu_custom_call.1} parent=11 // pred_fallthru
          _
        // Predicated region
        $region33: #{tpu_custom_call.1} parent=11 // pred_check
          %p225 = pneg %p169
        $region34: #{tpu_custom_call.1} parent=11 // pred_check_branch
          %227 = sbr.rel (%p225) target = $region36
        $region35: #{tpu_custom_call.1} parent=11 // pred_region
          %229 = vsyncadd [#allocation4], 0
          %s230 = sshll.u32 %s6, 4
          %s231 = int_to_ptr.hbm [resolvable:$true] %s230
          %s232 = sshll.u32 [#allocation3], 4
          %s233 = int_to_ptr.vmem [resolvable:$true] %s232
          %238 = dma.hbm_to_vmem [thread:$0]  %s231, 16384, %s233, [#allocation4], 512, 512, 32
        $region36: #{tpu_custom_call.1} parent=11 // pred_fallthru
          _
      $region12: #{tpu_custom_call.1} parent=5 // pred_fallthru
        _
      %p239 = scmp.lt.s32.totalorder %s17, 2
      // Predicated region
      $region37: #{tpu_custom_call.1} parent=5 // pred_check
        %p240 = pneg %p239
      $region38: #{tpu_custom_call.1} parent=5 // pred_check_branch
        %242 = sbr.rel (%p240) target = $region40
      $region39: #{tpu_custom_call.1} parent=5 // pred_region
        // Predicated region
        $region41: #{tpu_custom_call.1} parent=39 // pred_check
          %p243 = pneg %p37
        $region42: #{tpu_custom_call.1} parent=39 // pred_check_branch
          %245 = sbr.rel (%p243) target = $region44
        $region43: #{tpu_custom_call.1} parent=39 // pred_region
          %p246 = scmp.lt.s32.totalorder %s17, 1
          %s247 = scalar_select %p246, %s17, 1
          %s248 = smul.addr %s247, 3
          %s249 = smul.addr %s248, 2
          %s250 = scalar_lea.vmem %s0, %s249
        $region44: #{tpu_custom_call.1} parent=39 // pred_fallthru
          _
      $region40: #{tpu_custom_call.1} parent=5 // pred_fallthru
        _
      %p251 = scmp.le.s32.totalorder 1, %s17
      %p252 = scmp.lt.s32.totalorder %s17, 3
      %p253 = pnand %p251, %p252
      %p254 = pneg %p253
      // Predicated region
      $region45: #{tpu_custom_call.1} parent=5 // pred_check
        _
      $region46: #{tpu_custom_call.1} parent=5 // pred_check_branch
        %256 = sbr.rel (%p253) target = $region48
      $region47: #{tpu_custom_call.1} parent=5 // pred_region
        %s257 = ssub.s32 %s17, 1
        // Predicated region
        $region49: #{tpu_custom_call.1} parent=47 // pred_check
          %p258 = pneg %p169
        $region50: #{tpu_custom_call.1} parent=47 // pred_check_branch
          %260 = sbr.rel (%p258) target = $region52
        $region51: #{tpu_custom_call.1} parent=47 // pred_region
          %262 = dma.done [#allocation4], 16384
        $region52: #{tpu_custom_call.1} parent=47 // pred_fallthru
          _
        %p263 = scmp.lt.s32.totalorder %s22, 1
        %s264 = scalar_select %p263, %s22, 1
        %s265 = smul.addr %s264, 3
        %s266 = smul.addr %s265, 2
        %s267 = scalar_lea.vmem %s0, %s266
        %p268 = pneg %p43
        %p269 = pneg %p40
        %p270 = pneg %p64
        %p271 = pneg %p61
        %p272 = pneg %p85
        %p273 = pneg %p82
        %p274 = pneg %p106
        %p275 = pneg %p103
        %p276 = pneg %p127
        %p277 = pneg %p124
        %p278 = pneg %p148
        %p279 = pneg %p145
        %p280 = pneg %p169
        %p281 = pneg %p166
        %p282 = pneg %p195
        %p283 = pneg %p192
        %s284 = sand.u32 %s182, 1
        %s285 = scalar_lea.sflag [#allocation5], %s284
        %s286 = sand.u32 %s182, 1
        %s287 = smul.addr %s286, 64
        %s288 = scalar_lea.vmem [#allocation6], %s287
        %p289 = scmp.lt.s32.totalorder %s22, 1
        %s290 = scalar_select %p289, %s22, 1
        %s291 = smul.addr %s290, 3
        %s292 = smul.addr %s291, 2
        %s293 = scalar_lea.vmem %s0, %s292
        %v295 = vld [vmem:[%s293] sm:$0x3f]
        %v296 = vld [vmem:[%s1] sm:$0x3]
        %298 = vst [vmem:[#allocation1] ss:$9 sm:$0xff] %v296
        %v299 = vld [vmem:[#allocation1] sm:$0xff]
        %v300 = vld [vmem:[#allocation1 + $0x9] sm:$0xff]
        %v301 = vpack.i.b16 %v299, %v299
        %v303 = vperm.slane %v301, 0
        %v304 = vpack.i.b16 %v300, %v300
        %v306 = vperm.slane %v304, 0
        %v307 = vunpack.c.l.bf16 %v295
        %v308 = vunpack.c.l.bf16 %v303
        %v309 = vunpack.c.l.bf16 %v306
        %v312 = vrot.slane %v309, 4
        %vm313 = vcmask 1043456
        %v314 = vsel %vm313, %v308, %v312
        %v316 = vmul.f32 %v307, %v314
        %318 = vst [vmem:[#allocation1] ss:$2 sm:$0xff] %v316
        %v319 = vld.sshfl [vmem:[#allocation1] sm:$0xff pattern:$0x75316420]
        %v320 = vld.sshfl [vmem:[#allocation1 + $0x8] sm:$0xff pattern:$0x75316420]
        %v323 = vpack.c.bf16 %v320, %v319
        %324 = vst [vmem:[#allocation2] sm:$0x33] %v323
        %s326 = scalar_lea.vmem [#allocation1], 1
        %327 = vst [vmem:[%s326] ss:$2 sm:$0xff] %v295
        %v328 = vld.sshfl [vmem:[#allocation1] sm:$0xff pattern:$0x75643120]
        %v330 = vld.sshfl [vmem:[#allocation1 + $0x8] sm:$0xff pattern:$0x75643120]
        %332 = vrot.lane.b32.xlu0 %v328, 127
        %v333 = vpop.permute.xlu0 %332
        %334 = vrot.lane.b32.xlu0 %v330, 127
        %v335 = vpop.permute.xlu0 %334
        %v336 = vrot.slane %v333, 4
        %v337 = vrot.slane %v335, 4
        %vm338 = vcmask 1043456
        %v339 = vsel %vm338, %v336, %v337
        %vm340 = vcmask 1039360
        %v341 = vsel %vm340, %v333, %v339
        %343 = vst [vmem:[#allocation2] sm:$0xcc] %v341
        %344 = vst [vmem:[#allocation1] ss:$9 sm:$0xff] %v296
        %v345 = vld [vmem:[#allocation1] sm:$0xff]
        %v346 = vld [vmem:[#allocation1 + $0x9] sm:$0xff]
        %v347 = vshrl.u32 %v345, 16
        %v348 = vpack.i.b16 %v347, %v347
        %v350 = vperm.slane %v348, 0
        %v351 = vshrl.u32 %v346, 16
        %v352 = vpack.i.b16 %v351, %v351
        %v354 = vperm.slane %v352, 0
        %v355 = vunpack.c.h.bf16 %v295
        %v356 = vunpack.c.l.bf16 %v350
        %v357 = vunpack.c.l.bf16 %v354
        %v360 = vrot.slane %v357, 4
        %v361 = vsel %vm313, %v356, %v360
        %362 = vrot.lane.b32.xlu0 %v361, 2
        %v363 = vpop.permute.xlu0 %362
        %v364 = vrot.slane %v363, 4
        %vm365 = vcmask 15360
        %v366 = vsel %vm365, %v364, %v363
        %v369 = vmul.f32 %v307, %v366
        %v370 = vmul.f32 %v355, %v364
        %373 = vst [vmem:[#allocation1] ss:$2 sm:$0xff] %v369
        %s374 = scalar_lea.vmem [#allocation1], 16
        %375 = vst [vmem:[%s374] ss:$2 sm:$0xff] %v370
        %v376 = vld.sshfl [vmem:[#allocation1] sm:$0xff pattern:$0x75316420]
        %v377 = vld.sshfl [vmem:[#allocation1 + $0x8] sm:$0xff pattern:$0x75316420]
        %v378 = vld.sshfl [vmem:[#allocation1 + $0x10] sm:$0xff pattern:$0x75316420]
        %v382 = vpack.c.bf16 %v377, %v376
        %v383 = vpack.c.bf16 %v378, %v378
        %386 = vrot.lane.b32.xlu0 %v382, 126
        %v387 = vpop.permute.xlu0 %386
        %388 = vrot.lane.b32.xlu0 %v383, 126
        %v389 = vpop.permute.xlu0 %388
        %v390 = vrot.slane %v387, 4
        %v391 = vrot.slane %v389, 4
        %v392 = vsel %vm338, %v390, %v391
        %vm393 = vcmask 1031168
        %v394 = vsel %vm393, %v387, %v392
        %396 = vst [vmem:[#allocation2 + $0x8] sm:$0x33] %v394
        %397 = vrot.lane.b32.xlu0 %v314, 16
        %v398 = vpop.permute.xlu0 %397
        %v399 = vrot.slane %v398, 4
        %vm400 = vcmask 130048
        %v401 = vsel %vm400, %v399, %v398
        %v404 = vmul.f32 %v307, %v401
        %v405 = vmul.f32 %v355, %v399
        %408 = vst [vmem:[#allocation1] ss:$2 sm:$0xff] %v404
        %s409 = scalar_lea.vmem [#allocation1], 16
        %410 = vst [vmem:[%s409] ss:$2 sm:$0xff] %v405
        %v411 = vld.sshfl [vmem:[#allocation1] sm:$0xff pattern:$0x75316420]
        %v412 = vld.sshfl [vmem:[#allocation1 + $0x8] sm:$0xff pattern:$0x75316420]
        %v413 = vld.sshfl [vmem:[#allocation1 + $0x10] sm:$0xff pattern:$0x75316420]
        %v417 = vpack.c.bf16 %v412, %v411
        %v418 = vpack.c.bf16 %v413, %v413
        %v421 = vrot.slane %v417, 6
        %v422 = vrot.slane %v418, 6
        %423 = vrot.lane.b32.xlu0 %v421, 112
        %v424 = vpop.permute.xlu0 %423
        %425 = vrot.lane.b32.xlu0 %v422, 112
        %v426 = vpop.permute.xlu0 %425
        %v427 = vrot.slane %v424, 4
        %v428 = vrot.slane %v426, 4
        %v429 = vsel %vm338, %v427, %v428
        %vm430 = vcmask 916480
        %v431 = vsel %vm430, %v424, %v429
        %433 = vst [vmem:[#allocation2 + $0x8] sm:$0xcc] %v431
        %434 = vst [vmem:[#allocation1] ss:$2 sm:$0xff] %v295
        %v435 = vld.sshfl [vmem:[#allocation1] sm:$0xff pattern:$0x75643120]
        %v437 = vld.sshfl [vmem:[#allocation1 + $0x8] sm:$0xff pattern:$0x75643120]
        %439 = vrot.lane.b32.xlu0 %v435, 111
        %v440 = vpop.permute.xlu0 %439
        %441 = vrot.lane.b32.xlu0 %v437, 111
        %v442 = vpop.permute.xlu0 %441
        %v443 = vrot.slane %v440, 4
        %v444 = vrot.slane %v442, 4
        %v445 = vsel %vm338, %v443, %v444
        %vm446 = vcmask 908288
        %v447 = vsel %vm446, %v440, %v445
        %449 = vst [vmem:[#allocation2 + $0x10] sm:$0x33] %v447
        %450 = vrot.lane.b32.xlu0 %v361, 18
        %v451 = vpop.permute.xlu0 %450
        %v452 = vrot.slane %v451, 4
        %vm453 = vcmask 146432
        %v454 = vsel %vm453, %v452, %v451
        %v457 = vmul.f32 %v307, %v454
        %v458 = vmul.f32 %v355, %v452
        %461 = vst [vmem:[#allocation1] ss:$2 sm:$0xff] %v457
        %s462 = scalar_lea.vmem [#allocation1], 16
        %463 = vst [vmem:[%s462] ss:$2 sm:$0xff] %v458
        %v464 = vld.sshfl [vmem:[#allocation1] sm:$0xff pattern:$0x75316420]
        %v465 = vld.sshfl [vmem:[#allocation1 + $0x8] sm:$0xff pattern:$0x75316420]
        %v466 = vld.sshfl [vmem:[#allocation1 + $0x10] sm:$0xff pattern:$0x75316420]
        %v470 = vpack.c.bf16 %v465, %v464
        %v471 = vpack.c.bf16 %v466, %v466
        %v474 = vrot.slane %v470, 6
        %v475 = vrot.slane %v471, 6
        %476 = vrot.lane.b32.xlu0 %v474, 110
        %v477 = vpop.permute.xlu0 %476
        %478 = vrot.lane.b32.xlu0 %v475, 110
        %v479 = vpop.permute.xlu0 %478
        %v480 = vrot.slane %v477, 4
        %v481 = vrot.slane %v479, 4
        %v482 = vsel %vm338, %v480, %v481
        %vm483 = vcmask 900096
        %v484 = vsel %vm483, %v477, %v482
        %486 = vst [vmem:[#allocation2 + $0x10] sm:$0xcc] %v484
        %487 = vrot.lane.b32.xlu0 %v314, 32
        %v488 = vpop.permute.xlu0 %487
        %v489 = vrot.slane %v488, 4
        %vm490 = vcmask 261120
        %v491 = vsel %vm490, %v489, %v488
        %v494 = vmul.f32 %v307, %v491
        %v495 = vmul.f32 %v355, %v489
        %498 = vst [vmem:[#allocation1] ss:$2 sm:$0xff] %v494
        %s499 = scalar_lea.vmem [#allocation1], 16
        %500 = vst [vmem:[%s499] ss:$2 sm:$0xff] %v495
        %v501 = vld.sshfl [vmem:[#allocation1] sm:$0xff pattern:$0x75316420]
        %v502 = vld.sshfl [vmem:[#allocation1 + $0x8] sm:$0xff pattern:$0x75316420]
        %v503 = vld.sshfl [vmem:[#allocation1 + $0x10] sm:$0xff pattern:$0x75316420]
        %v507 = vpack.c.bf16 %v502, %v501
        %v508 = vpack.c.bf16 %v503, %v503
        %511 = vrot.lane.b32.xlu0 %v507, 96
        %v512 = vpop.permute.xlu0 %511
        %513 = vrot.lane.b32.xlu0 %v508, 96
        %v514 = vpop.permute.xlu0 %513
        %v515 = vrot.slane %v512, 4
        %v516 = vrot.slane %v514, 4
        %v517 = vsel %vm338, %v515, %v516
        %vm518 = vcmask 785408
        %v519 = vsel %vm518, %v512, %v517
        %521 = vst [vmem:[#allocation2 + $0x18] sm:$0x33] %v519
        %s522 = scalar_lea.vmem [#allocation1], 1
        %523 = vst [vmem:[%s522] ss:$2 sm:$0xff] %v295
        %v524 = vld.sshfl [vmem:[#allocation1] sm:$0xff pattern:$0x75643120]
        %v526 = vld.sshfl [vmem:[#allocation1 + $0x8] sm:$0xff pattern:$0x75643120]
        %528 = vrot.lane.b32.xlu0 %v524, 95
        %v529 = vpop.permute.xlu0 %528
        %530 = vrot.lane.b32.xlu0 %v526, 95
        %v531 = vpop.permute.xlu0 %530
        %v532 = vrot.slane %v529, 4
        %v533 = vrot.slane %v531, 4
        %v534 = vsel %vm338, %v532, %v533
        %vm535 = vcmask 777216
        %v536 = vsel %vm535, %v529, %v534
        %538 = vst [vmem:[#allocation2 + $0x18] sm:$0xcc] %v536
        %539 = vrot.lane.b32.xlu0 %v361, 34
        %v540 = vpop.permute.xlu0 %539
        %v541 = vrot.slane %v540, 4
        %vm542 = vcmask 277504
        %v543 = vsel %vm542, %v541, %v540
        %v546 = vmul.f32 %v307, %v543
        %v547 = vmul.f32 %v355, %v541
        %550 = vst [vmem:[#allocation1] ss:$2 sm:$0xff] %v546
        %s551 = scalar_lea.vmem [#allocation1], 16
        %552 = vst [vmem:[%s551] ss:$2 sm:$0xff] %v547
        %v553 = vld.sshfl [vmem:[#allocation1] sm:$0xff pattern:$0x75316420]
        %v554 = vld.sshfl [vmem:[#allocation1 + $0x8] sm:$0xff pattern:$0x75316420]
        %v555 = vld.sshfl [vmem:[#allocation1 + $0x10] sm:$0xff pattern:$0x75316420]
        %v559 = vpack.c.bf16 %v554, %v553
        %v560 = vpack.c.bf16 %v555, %v555
        %563 = vrot.lane.b32.xlu0 %v559, 94
        %v564 = vpop.permute.xlu0 %563
        %565 = vrot.lane.b32.xlu0 %v560, 94
        %v566 = vpop.permute.xlu0 %565
        %v567 = vrot.slane %v564, 4
        %v568 = vrot.slane %v566, 4
        %v569 = vsel %vm338, %v567, %v568
        %vm570 = vcmask 769024
        %v571 = vsel %vm570, %v564, %v569
        %573 = vst [vmem:[#allocation2 + $0x20] sm:$0x33] %v571
        %v574 = vld [vmem:[%s2] sm:$0xf]
        %v575 = vld [vmem:[%s2 + $0x4] sm:$0xf]
        %v576 = vld [vmem:[%s2 + $0x8] sm:$0xf]
        %v577 = vld [vmem:[%s2 + $0xc] sm:$0xf]
        %v578 = vld [vmem:[%s2 + $0x10] sm:$0xf]
        %v579 = vld [vmem:[%s2 + $0x14] sm:$0xf]
        %v580 = vld [vmem:[%s2 + $0x18] sm:$0xf]
        %v581 = vld [vmem:[%s2 + $0x1c] sm:$0xf]
        %v582 = vld [vmem:[%s2 + $0x20] sm:$0xf]
        %v583 = vld [vmem:[%s2 + $0x24] sm:$0xf]
        %v584 = vld [vmem:[%s2 + $0x28] sm:$0xf]
        %v585 = vld [vmem:[%s2 + $0x2c] sm:$0xf]
        %v586 = vld [vmem:[%s2 + $0x30] sm:$0xf]
        %v587 = vld [vmem:[%s2 + $0x34] sm:$0xf]
        %v588 = vld [vmem:[%s2 + $0x38] sm:$0xf]
        %v589 = vld [vmem:[%s2 + $0x3c] sm:$0xf]
        %v590 = vld [vmem:[%s2 + $0x40] sm:$0xf]
        %v591 = vld [vmem:[%s2 + $0x44] sm:$0xf]
        %v592 = vld [vmem:[%s2 + $0x48] sm:$0xf]
        %v593 = vld [vmem:[%s2 + $0x4c] sm:$0xf]
        %v594 = vld [vmem:[%s2 + $0x50] sm:$0xf]
        %v595 = vld [vmem:[%s2 + $0x54] sm:$0xf]
        %v596 = vld [vmem:[%s2 + $0x58] sm:$0xf]
        %v597 = vld [vmem:[%s2 + $0x5c] sm:$0xf]
        %v598 = vld [vmem:[%s2 + $0x60] sm:$0xf]
        %v599 = vld [vmem:[%s2 + $0x64] sm:$0xf]
        %v600 = vld [vmem:[%s2 + $0x68] sm:$0xf]
        %v601 = vld [vmem:[%s2 + $0x6c] sm:$0xf]
        %v602 = vld [vmem:[%s2 + $0x70] sm:$0xf]
        %v603 = vld [vmem:[%s2 + $0x74] sm:$0xf]
        %v604 = vld [vmem:[%s2 + $0x78] sm:$0xf]
        %v605 = vld [vmem:[%s2 + $0x7c] sm:$0xf]
        %v606 = vld [vmem:[#allocation2] sm:$0xff]
        %v607 = vld [vmem:[#allocation2 + $0x8] sm:$0xff]
        %v608 = vld [vmem:[#allocation2 + $0x10] sm:$0xff]
        %v609 = vld [vmem:[#allocation2 + $0x18] sm:$0xff]
        %v610 = vld [vmem:[#allocation2 + $0x20] sm:$0x33]
        %v611 = vld [vmem:[%s3] sm:$0xff]
        %v612 = vld [vmem:[%s3 + $0x8] sm:$0xff]
        %v613 = vld [vmem:[%s3 + $0x10] sm:$0xff]
        %v614 = vld [vmem:[%s3 + $0x18] sm:$0xff]
        %v615 = vld [vmem:[%s3 + $0x20] sm:$0xff]
        %v616 = vld [vmem:[%s3 + $0x28] sm:$0xff]
        %v617 = vld [vmem:[%s3 + $0x30] sm:$0xff]
        %v618 = vld [vmem:[%s3 + $0x38] sm:$0xff]
        %v619 = vld [vmem:[%s3 + $0x40] sm:$0xff]
        %v620 = vld [vmem:[%s3 + $0x48] sm:$0xff]
        %v621 = vld [vmem:[%s3 + $0x50] sm:$0xff]
        %v622 = vld [vmem:[%s3 + $0x58] sm:$0xff]
        %v623 = vld [vmem:[%s3 + $0x60] sm:$0xff]
        %v624 = vld [vmem:[%s3 + $0x68] sm:$0xff]
        %v625 = vld [vmem:[%s3 + $0x70] sm:$0xff]
        %v626 = vld [vmem:[%s3 + $0x78] sm:$0xff]
        %v627 = vld [vmem:[%s3 + $0x80] sm:$0xff]
        %v628 = vld [vmem:[%s3 + $0x88] sm:$0xff]
        %v629 = vld [vmem:[%s3 + $0x90] sm:$0xff]
        %v630 = vld [vmem:[%s3 + $0x98] sm:$0xff]
        %v631 = vld [vmem:[%s3 + $0xa0] sm:$0xff]
        %v632 = vld [vmem:[%s3 + $0xa8] sm:$0xff]
        %v633 = vld [vmem:[%s3 + $0xb0] sm:$0xff]
        %v634 = vld [vmem:[%s3 + $0xb8] sm:$0xff]
        %v635 = vld [vmem:[%s3 + $0xc0] sm:$0xff]
        %v636 = vld [vmem:[%s3 + $0xc8] sm:$0xff]
        %v637 = vld [vmem:[%s3 + $0xd0] sm:$0xff]
        %v638 = vld [vmem:[%s3 + $0xd8] sm:$0xff]
        %v639 = vld [vmem:[%s3 + $0xe0] sm:$0xff]
        %v640 = vld [vmem:[%s3 + $0xe8] sm:$0xff]
        %v641 = vld [vmem:[%s3 + $0xf0] sm:$0xff]
        %v642 = vld [vmem:[%s3 + $0xf8] sm:$0xff]
        %644 = vset.pattern.permute.xlu0 0
        %645 = vperm.xlu0 %644, %v611
        %v646 = vpop.permute.xlu0 %645
        %649 = vset.pattern.permute.xlu0 0
        %650 = vperm.xlu0 %649, %v612
        %v651 = vpop.permute.xlu0 %650
        %654 = vset.pattern.permute.xlu0 0
        %655 = vperm.xlu0 %654, %v613
        %v656 = vpop.permute.xlu0 %655
        %659 = vset.pattern.permute.xlu0 0
        %660 = vperm.xlu0 %659, %v614
        %v661 = vpop.permute.xlu0 %660
        %664 = vset.pattern.permute.xlu0 0
        %665 = vperm.xlu0 %664, %v615
        %v666 = vpop.permute.xlu0 %665
        %669 = vset.pattern.permute.xlu0 0
        %670 = vperm.xlu0 %669, %v616
        %v671 = vpop.permute.xlu0 %670
        %674 = vset.pattern.permute.xlu0 0
        %675 = vperm.xlu0 %674, %v617
        %v676 = vpop.permute.xlu0 %675
        %679 = vset.pattern.permute.xlu0 0
        %680 = vperm.xlu0 %679, %v618
        %v681 = vpop.permute.xlu0 %680
        %684 = vset.pattern.permute.xlu0 0
        %685 = vperm.xlu0 %684, %v619
        %v686 = vpop.permute.xlu0 %685
        %689 = vset.pattern.permute.xlu0 0
        %690 = vperm.xlu0 %689, %v620
        %v691 = vpop.permute.xlu0 %690
        %694 = vset.pattern.permute.xlu0 0
        %695 = vperm.xlu0 %694, %v621
        %v696 = vpop.permute.xlu0 %695
        %699 = vset.pattern.permute.xlu0 0
        %700 = vperm.xlu0 %699, %v622
        %v701 = vpop.permute.xlu0 %700
        %704 = vset.pattern.permute.xlu0 0
        %705 = vperm.xlu0 %704, %v623
        %v706 = vpop.permute.xlu0 %705
        %709 = vset.pattern.permute.xlu0 0
        %710 = vperm.xlu0 %709, %v624
        %v711 = vpop.permute.xlu0 %710
        %714 = vset.pattern.permute.xlu0 0
        %715 = vperm.xlu0 %714, %v625
        %v716 = vpop.permute.xlu0 %715
        %719 = vset.pattern.permute.xlu0 0
        %720 = vperm.xlu0 %719, %v626
        %v721 = vpop.permute.xlu0 %720
        %724 = vset.pattern.permute.xlu0 0
        %725 = vperm.xlu0 %724, %v627
        %v726 = vpop.permute.xlu0 %725
        %729 = vset.pattern.permute.xlu0 0
        %730 = vperm.xlu0 %729, %v628
        %v731 = vpop.permute.xlu0 %730
        %734 = vset.pattern.permute.xlu0 0
        %735 = vperm.xlu0 %734, %v629
        %v736 = vpop.permute.xlu0 %735
        %739 = vset.pattern.permute.xlu0 0
        %740 = vperm.xlu0 %739, %v630
        %v741 = vpop.permute.xlu0 %740
        %744 = vset.pattern.permute.xlu0 0
        %745 = vperm.xlu0 %744, %v631
        %v746 = vpop.permute.xlu0 %745
        %749 = vset.pattern.permute.xlu0 0
        %750 = vperm.xlu0 %749, %v632
        %v751 = vpop.permute.xlu0 %750
        %754 = vset.pattern.permute.xlu0 0
        %755 = vperm.xlu0 %754, %v633
        %v756 = vpop.permute.xlu0 %755
        %759 = vset.pattern.permute.xlu0 0
        %760 = vperm.xlu0 %759, %v634
        %v761 = vpop.permute.xlu0 %760
        %764 = vset.pattern.permute.xlu0 0
        %765 = vperm.xlu0 %764, %v635
        %v766 = vpop.permute.xlu0 %765
        %769 = vset.pattern.permute.xlu0 0
        %770 = vperm.xlu0 %769, %v636
        %v771 = vpop.permute.xlu0 %770
        %774 = vset.pattern.permute.xlu0 0
        %775 = vperm.xlu0 %774, %v637
        %v776 = vpop.permute.xlu0 %775
        %779 = vset.pattern.permute.xlu0 0
        %780 = vperm.xlu0 %779, %v638
        %v781 = vpop.permute.xlu0 %780
        %784 = vset.pattern.permute.xlu0 0
        %785 = vperm.xlu0 %784, %v639
        %v786 = vpop.permute.xlu0 %785
        %789 = vset.pattern.permute.xlu0 0
        %790 = vperm.xlu0 %789, %v640
        %v791 = vpop.permute.xlu0 %790
        %794 = vset.pattern.permute.xlu0 0
        %795 = vperm.xlu0 %794, %v641
        %v796 = vpop.permute.xlu0 %795
        %799 = vset.pattern.permute.xlu0 0
        %800 = vperm.xlu0 %799, %v642
        %v801 = vpop.permute.xlu0 %800
        %v835 = vunpack.c.l.b16 %v574
        %v836 = vunpack.c.l.b16 %v575
        %v837 = vunpack.c.l.b16 %v576
        %v838 = vunpack.c.l.b16 %v577
        %v839 = vunpack.c.l.b16 %v578
        %v840 = vunpack.c.l.b16 %v579
        %v841 = vunpack.c.l.b16 %v580
        %v842 = vunpack.c.l.b16 %v581
        %v843 = vunpack.c.l.b16 %v582
        %v844 = vunpack.c.l.b16 %v583
        %v845 = vunpack.c.l.b16 %v584
        %v846 = vunpack.c.l.b16 %v585
        %v847 = vunpack.c.l.b16 %v586
        %v848 = vunpack.c.l.b16 %v587
        %v849 = vunpack.c.l.b16 %v588
        %v850 = vunpack.c.l.b16 %v589
        %v851 = vunpack.c.l.b16 %v590
        %v852 = vunpack.c.l.b16 %v591
        %v853 = vunpack.c.l.b16 %v592
        %v854 = vunpack.c.l.b16 %v593
        %v855 = vunpack.c.l.b16 %v594
        %v856 = vunpack.c.l.b16 %v595
        %v857 = vunpack.c.l.b16 %v596
        %v858 = vunpack.c.l.b16 %v597
        %v859 = vunpack.c.l.b16 %v598
        %v860 = vunpack.c.l.b16 %v599
        %v861 = vunpack.c.l.b16 %v600
        %v862 = vunpack.c.l.b16 %v601
        %v863 = vunpack.c.l.b16 %v602
        %v864 = vunpack.c.l.b16 %v603
        %v865 = vunpack.c.l.b16 %v604
        %v866 = vunpack.c.l.b16 %v605
        %v867 = vpack.c.b16 %v836, %v835
        %v868 = vpack.c.b16 %v838, %v837
        %v869 = vpack.c.b16 %v840, %v839
        %v870 = vpack.c.b16 %v842, %v841
        %v871 = vpack.c.b16 %v844, %v843
        %v872 = vpack.c.b16 %v846, %v845
        %v873 = vpack.c.b16 %v848, %v847
        %v874 = vpack.c.b16 %v850, %v849
        %v875 = vpack.c.b16 %v852, %v851
        %v876 = vpack.c.b16 %v854, %v853
        %v877 = vpack.c.b16 %v856, %v855
        %v878 = vpack.c.b16 %v858, %v857
        %v879 = vpack.c.b16 %v860, %v859
        %v880 = vpack.c.b16 %v862, %v861
        %v881 = vpack.c.b16 %v864, %v863
        %v882 = vpack.c.b16 %v866, %v865
        %v888 = vunpack.c.l.b16 %v606
        %v889 = vunpack.c.h.b16 %v606
        %v890 = vunpack.c.l.b16 %v607
        %v891 = vunpack.c.h.b16 %v607
        %v892 = vunpack.c.l.b16 %v608
        %v893 = vunpack.c.h.b16 %v608
        %v894 = vunpack.c.l.b16 %v609
        %v895 = vunpack.c.h.b16 %v609
        %v896 = vunpack.c.l.b16 %v610
        %v897 = vunpack.c.h.b16 %v610
        %v898 = vpack.c.b16 %v890, %v888
        %v899 = vpack.c.b16 %v891, %v889
        %v900 = vpack.c.b16 %v894, %v892
        %v901 = vpack.c.b16 %v895, %v893
        %v902 = vpack.c.b16 %v896, %v896
        %v903 = vpack.c.b16 %v897, %v897
        %vm908 = vcmask 293888
        %v910 = vsel %vm908, %v867, 0
        %v913 = vsel %vm908, %v868, 0
        %v916 = vsel %vm908, %v869, 0
        %v919 = vsel %vm908, %v870, 0
        %v922 = vsel %vm908, %v871, 0
        %v925 = vsel %vm908, %v872, 0
        %v928 = vsel %vm908, %v873, 0
        %v931 = vsel %vm908, %v874, 0
        %v934 = vsel %vm908, %v875, 0
        %v937 = vsel %vm908, %v876, 0
        %v940 = vsel %vm908, %v877, 0
        %v943 = vsel %vm908, %v878, 0
        %v946 = vsel %vm908, %v879, 0
        %v949 = vsel %vm908, %v880, 0
        %v952 = vsel %vm908, %v881, 0
        %v955 = vsel %vm908, %v882, 0
        %vm957 = vcmask 1041408
        %v959 = vsel %vm957, %v902, 0
        %v962 = vsel %vm957, %v903, 0
        %964 = vmatpush.bf16.msra.mxu0 0
        %965 = vmatpush.bf16.msra.mxu0 0
        %966 = vmatpush.bf16.msra.mxu0 0
        %967 = vmatpush.bf16.msra.mxu0 0
        %968 = vmatpush.bf16.msra.mxu0 0
        %969 = vmatpush.bf16.msra.mxu0 %v959
        %970 = vmatpush.bf16.msra.mxu0 %v900
        %971 = vmatpush.bf16.msra.mxu0 %v898
        %972 = vmatmul.bf16.gmra.mxu0 %v910
        %v973 = vpop.f32.mrf.mxu0
        %v974 = vadd.f32 %v646, %v973
        %v975 = vpop.f32.mrf.mxu0
        %v976 = vadd.f32 %v651, %v975
        %977 = vmatmul.bf16.gmra.mxu0 %v913
        %v978 = vpop.f32.mrf.mxu0
        %v979 = vadd.f32 %v656, %v978
        %v980 = vpop.f32.mrf.mxu0
        %v981 = vadd.f32 %v661, %v980
        %982 = vmatmul.bf16.gmra.mxu0 %v916
        %v983 = vpop.f32.mrf.mxu0
        %v984 = vadd.f32 %v666, %v983
        %v985 = vpop.f32.mrf.mxu0
        %v986 = vadd.f32 %v671, %v985
        %987 = vmatmul.bf16.gmra.mxu0 %v919
        %v988 = vpop.f32.mrf.mxu0
        %v989 = vadd.f32 %v676, %v988
        %v990 = vpop.f32.mrf.mxu0
        %v991 = vadd.f32 %v681, %v990
        %992 = vmatmul.bf16.gmra.mxu0 %v922
        %v993 = vpop.f32.mrf.mxu0
        %v994 = vadd.f32 %v686, %v993
        %v995 = vpop.f32.mrf.mxu0
        %v996 = vadd.f32 %v691, %v995
        %997 = vmatmul.bf16.gmra.mxu0 %v925
        %v998 = vpop.f32.mrf.mxu0
        %v999 = vadd.f32 %v696, %v998
        %v1000 = vpop.f32.mrf.mxu0
        %v1001 = vadd.f32 %v701, %v1000
        %1002 = vmatmul.bf16.gmra.mxu0 %v928
        %v1003 = vpop.f32.mrf.mxu0
        %v1004 = vadd.f32 %v706, %v1003
        %v1005 = vpop.f32.mrf.mxu0
        %v1006 = vadd.f32 %v711, %v1005
        %1007 = vmatmul.bf16.gmra.mxu0 %v931
        %v1008 = vpop.f32.mrf.mxu0
        %v1009 = vadd.f32 %v716, %v1008
        %v1010 = vpop.f32.mrf.mxu0
        %v1011 = vadd.f32 %v721, %v1010
        %1012 = vmatmul.bf16.gmra.mxu0 %v934
        %v1013 = vpop.f32.mrf.mxu0
        %v1014 = vadd.f32 %v726, %v1013
        %v1015 = vpop.f32.mrf.mxu0
        %v1016 = vadd.f32 %v731, %v1015
        %1017 = vmatmul.bf16.gmra.mxu0 %v937
        %v1018 = vpop.f32.mrf.mxu0
        %v1019 = vadd.f32 %v736, %v1018
        %v1020 = vpop.f32.mrf.mxu0
        %v1021 = vadd.f32 %v741, %v1020
        %1022 = vmatmul.bf16.gmra.mxu0 %v940
        %v1023 = vpop.f32.mrf.mxu0
        %v1024 = vadd.f32 %v746, %v1023
        %v1025 = vpop.f32.mrf.mxu0
        %v1026 = vadd.f32 %v751, %v1025
        %1027 = vmatmul.bf16.gmra.mxu0 %v943
        %v1028 = vpop.f32.mrf.mxu0
        %v1029 = vadd.f32 %v756, %v1028
        %v1030 = vpop.f32.mrf.mxu0
        %v1031 = vadd.f32 %v761, %v1030
        %1032 = vmatmul.bf16.gmra.mxu0 %v946
        %v1033 = vpop.f32.mrf.mxu0
        %v1034 = vadd.f32 %v766, %v1033
        %v1035 = vpop.f32.mrf.mxu0
        %v1036 = vadd.f32 %v771, %v1035
        %1037 = vmatmul.bf16.gmra.mxu0 %v949
        %v1038 = vpop.f32.mrf.mxu0
        %v1039 = vadd.f32 %v776, %v1038
        %v1040 = vpop.f32.mrf.mxu0
        %v1041 = vadd.f32 %v781, %v1040
        %1042 = vmatmul.bf16.gmra.mxu0 %v952
        %v1043 = vpop.f32.mrf.mxu0
        %v1044 = vadd.f32 %v786, %v1043
        %v1045 = vpop.f32.mrf.mxu0
        %v1046 = vadd.f32 %v791, %v1045
        %1047 = vmatmul.bf16.gmra.mxu0 %v955
        %v1048 = vpop.f32.mrf.mxu0
        %v1049 = vadd.f32 %v796, %v1048
        %v1050 = vpop.f32.mrf.mxu0
        %v1051 = vadd.f32 %v801, %v1050
        %1052 = vdwg.mxu0
        %1053 = vmatpush.bf16.msra.mxu0 0
        %1054 = vmatpush.bf16.msra.mxu0 0
        %1055 = vmatpush.bf16.msra.mxu0 0
        %1056 = vmatpush.bf16.msra.mxu0 0
        %1057 = vmatpush.bf16.msra.mxu0 0
        %1058 = vmatpush.bf16.msra.mxu0 %v962
        %1059 = vmatpush.bf16.msra.mxu0 %v901
        %1060 = vmatpush.bf16.msra.mxu0 %v899
        %1061 = vmatmul.bf16.gmra.mxu0 %v910
        %v1062 = vpop.f32.mrf.mxu0
        %v1063 = vadd.f32 %v646, %v1062
        %v1064 = vpop.f32.mrf.mxu0
        %v1065 = vadd.f32 %v651, %v1064
        %1066 = vmatmul.bf16.gmra.mxu0 %v913
        %v1067 = vpop.f32.mrf.mxu0
        %v1068 = vadd.f32 %v656, %v1067
        %v1069 = vpop.f32.mrf.mxu0
        %v1070 = vadd.f32 %v661, %v1069
        %1071 = vmatmul.bf16.gmra.mxu0 %v916
        %v1072 = vpop.f32.mrf.mxu0
        %v1073 = vadd.f32 %v666, %v1072
        %v1074 = vpop.f32.mrf.mxu0
        %v1075 = vadd.f32 %v671, %v1074
        %1076 = vmatmul.bf16.gmra.mxu0 %v919
        %v1077 = vpop.f32.mrf.mxu0
        %v1078 = vadd.f32 %v676, %v1077
        %v1079 = vpop.f32.mrf.mxu0
        %v1080 = vadd.f32 %v681, %v1079
        %1081 = vmatmul.bf16.gmra.mxu0 %v922
        %v1082 = vpop.f32.mrf.mxu0
        %v1083 = vadd.f32 %v686, %v1082
        %v1084 = vpop.f32.mrf.mxu0
        %v1085 = vadd.f32 %v691, %v1084
        %1086 = vmatmul.bf16.gmra.mxu0 %v925
        %v1087 = vpop.f32.mrf.mxu0
        %v1088 = vadd.f32 %v696, %v1087
        %v1089 = vpop.f32.mrf.mxu0
        %v1090 = vadd.f32 %v701, %v1089
        %1091 = vmatmul.bf16.gmra.mxu0 %v928
        %v1092 = vpop.f32.mrf.mxu0
        %v1093 = vadd.f32 %v706, %v1092
        %v1094 = vpop.f32.mrf.mxu0
        %v1095 = vadd.f32 %v711, %v1094
        %1096 = vmatmul.bf16.gmra.mxu0 %v931
        %v1097 = vpop.f32.mrf.mxu0
        %v1098 = vadd.f32 %v716, %v1097
        %v1099 = vpop.f32.mrf.mxu0
        %v1100 = vadd.f32 %v721, %v1099
        %1101 = vmatmul.bf16.gmra.mxu0 %v934
        %v1102 = vpop.f32.mrf.mxu0
        %v1103 = vadd.f32 %v726, %v1102
        %v1104 = vpop.f32.mrf.mxu0
        %v1105 = vadd.f32 %v731, %v1104
        %1106 = vmatmul.bf16.gmra.mxu0 %v937
        %v1107 = vpop.f32.mrf.mxu0
        %v1108 = vadd.f32 %v736, %v1107
        %v1109 = vpop.f32.mrf.mxu0
        %v1110 = vadd.f32 %v741, %v1109
        %1111 = vmatmul.bf16.gmra.mxu0 %v940
        %v1112 = vpop.f32.mrf.mxu0
        %v1113 = vadd.f32 %v746, %v1112
        %v1114 = vpop.f32.mrf.mxu0
        %v1115 = vadd.f32 %v751, %v1114
        %1116 = vmatmul.bf16.gmra.mxu0 %v943
        %v1117 = vpop.f32.mrf.mxu0
        %v1118 = vadd.f32 %v756, %v1117
        %v1119 = vpop.f32.mrf.mxu0
        %v1120 = vadd.f32 %v761, %v1119
        %1121 = vmatmul.bf16.gmra.mxu0 %v946
        %v1122 = vpop.f32.mrf.mxu0
        %v1123 = vadd.f32 %v766, %v1122
        %v1124 = vpop.f32.mrf.mxu0
        %v1125 = vadd.f32 %v771, %v1124
        %1126 = vmatmul.bf16.gmra.mxu0 %v949
        %v1127 = vpop.f32.mrf.mxu0
        %v1128 = vadd.f32 %v776, %v1127
        %v1129 = vpop.f32.mrf.mxu0
        %v1130 = vadd.f32 %v781, %v1129
        %1131 = vmatmul.bf16.gmra.mxu0 %v952
        %v1132 = vpop.f32.mrf.mxu0
        %v1133 = vadd.f32 %v786, %v1132
        %v1134 = vpop.f32.mrf.mxu0
        %v1135 = vadd.f32 %v791, %v1134
        %1136 = vmatmul.bf16.gmra.mxu0 %v955
        %v1137 = vpop.f32.mrf.mxu0
        %v1138 = vadd.f32 %v796, %v1137
        %v1139 = vpop.f32.mrf.mxu0
        %v1140 = vadd.f32 %v801, %v1139
        %1141 = vdwg.mxu0
        %v1142 = vmax.f32 %v974, 0.0
        %v1143 = vmax.f32 %v1063, 0.0
        %v1144 = vmax.f32 %v976, 0.0
        %v1145 = vmax.f32 %v1065, 0.0
        %v1146 = vmax.f32 %v979, 0.0
        %v1147 = vmax.f32 %v1068, 0.0
        %v1148 = vmax.f32 %v981, 0.0
        %v1149 = vmax.f32 %v1070, 0.0
        %v1150 = vmax.f32 %v984, 0.0
        %v1151 = vmax.f32 %v1073, 0.0
        %v1152 = vmax.f32 %v986, 0.0
        %v1153 = vmax.f32 %v1075, 0.0
        %v1154 = vmax.f32 %v989, 0.0
        %v1155 = vmax.f32 %v1078, 0.0
        %v1156 = vmax.f32 %v991, 0.0
        %v1157 = vmax.f32 %v1080, 0.0
        %v1158 = vmax.f32 %v994, 0.0
        %v1159 = vmax.f32 %v1083, 0.0
        %v1160 = vmax.f32 %v996, 0.0
        %v1161 = vmax.f32 %v1085, 0.0
        %v1162 = vmax.f32 %v999, 0.0
        %v1163 = vmax.f32 %v1088, 0.0
        %v1164 = vmax.f32 %v1001, 0.0
        %v1165 = vmax.f32 %v1090, 0.0
        %v1166 = vmax.f32 %v1004, 0.0
        %v1167 = vmax.f32 %v1093, 0.0
        %v1168 = vmax.f32 %v1006, 0.0
        %v1169 = vmax.f32 %v1095, 0.0
        %v1170 = vmax.f32 %v1009, 0.0
        %v1171 = vmax.f32 %v1098, 0.0
        %v1172 = vmax.f32 %v1011, 0.0
        %v1173 = vmax.f32 %v1100, 0.0
        %v1174 = vmax.f32 %v1014, 0.0
        %v1175 = vmax.f32 %v1103, 0.0
        %v1176 = vmax.f32 %v1016, 0.0
        %v1177 = vmax.f32 %v1105, 0.0
        %v1178 = vmax.f32 %v1019, 0.0
        %v1179 = vmax.f32 %v1108, 0.0
        %v1180 = vmax.f32 %v1021, 0.0
        %v1181 = vmax.f32 %v1110, 0.0
        %v1182 = vmax.f32 %v1024, 0.0
        %v1183 = vmax.f32 %v1113, 0.0
        %v1184 = vmax.f32 %v1026, 0.0
        %v1185 = vmax.f32 %v1115, 0.0
        %v1186 = vmax.f32 %v1029, 0.0
        %v1187 = vmax.f32 %v1118, 0.0
        %v1188 = vmax.f32 %v1031, 0.0
        %v1189 = vmax.f32 %v1120, 0.0
        %v1190 = vmax.f32 %v1034, 0.0
        %v1191 = vmax.f32 %v1123, 0.0
        %v1192 = vmax.f32 %v1036, 0.0
        %v1193 = vmax.f32 %v1125, 0.0
        %v1194 = vmax.f32 %v1039, 0.0
        %v1195 = vmax.f32 %v1128, 0.0
        %v1196 = vmax.f32 %v1041, 0.0
        %v1197 = vmax.f32 %v1130, 0.0
        %v1198 = vmax.f32 %v1044, 0.0
        %v1199 = vmax.f32 %v1133, 0.0
        %v1200 = vmax.f32 %v1046, 0.0
        %v1201 = vmax.f32 %v1135, 0.0
        %v1202 = vmax.f32 %v1049, 0.0
        %v1203 = vmax.f32 %v1138, 0.0
        %v1204 = vmax.f32 %v1051, 0.0
        %v1205 = vmax.f32 %v1140, 0.0
        %v1206 = vld [vmem:[%s4] sm:$0xff]
        %v1207 = vpack.c.bf16 %v1144, %v1142
        %v1208 = vpack.c.bf16 %v1145, %v1143
        %v1209 = vpack.c.bf16 %v1148, %v1146
        %v1210 = vpack.c.bf16 %v1149, %v1147
        %v1211 = vpack.c.bf16 %v1152, %v1150
        %v1212 = vpack.c.bf16 %v1153, %v1151
        %v1213 = vpack.c.bf16 %v1156, %v1154
        %v1214 = vpack.c.bf16 %v1157, %v1155
        %v1215 = vpack.c.bf16 %v1160, %v1158
        %v1216 = vpack.c.bf16 %v1161, %v1159
        %v1217 = vpack.c.bf16 %v1164, %v1162
        %v1218 = vpack.c.bf16 %v1165, %v1163
        %v1219 = vpack.c.bf16 %v1168, %v1166
        %v1220 = vpack.c.bf16 %v1169, %v1167
        %v1221 = vpack.c.bf16 %v1172, %v1170
        %v1222 = vpack.c.bf16 %v1173, %v1171
        %v1223 = vpack.c.bf16 %v1176, %v1174
        %v1224 = vpack.c.bf16 %v1177, %v1175
        %v1225 = vpack.c.bf16 %v1180, %v1178
        %v1226 = vpack.c.bf16 %v1181, %v1179
        %v1227 = vpack.c.bf16 %v1184, %v1182
        %v1228 = vpack.c.bf16 %v1185, %v1183
        %v1229 = vpack.c.bf16 %v1188, %v1186
        %v1230 = vpack.c.bf16 %v1189, %v1187
        %v1231 = vpack.c.bf16 %v1192, %v1190
        %v1232 = vpack.c.bf16 %v1193, %v1191
        %v1233 = vpack.c.bf16 %v1196, %v1194
        %v1234 = vpack.c.bf16 %v1197, %v1195
        %v1235 = vpack.c.bf16 %v1200, %v1198
        %v1236 = vpack.c.bf16 %v1201, %v1199
        %v1237 = vpack.c.bf16 %v1204, %v1202
        %v1238 = vpack.c.bf16 %v1205, %v1203
        %v1239 = vld [vmem:[%s5] sm:$0xff]
        %1241 = vset.pattern.permute.xlu0 0
        %1242 = vperm.xlu0 %1241, %v1239
        %v1243 = vpop.permute.xlu0 %1242
        %v1246 = vunpack.c.l.b16 %v1206
        %v1247 = vunpack.c.h.b16 %v1206
        %v1248 = vpack.c.b16 %v1246, %v1246
        %v1249 = vpack.c.b16 %v1247, %v1247
        %1252 = vmatpush.bf16.msra.mxu0 %v1221
        %1253 = vmatpush.bf16.msra.mxu0 %v1219
        %1254 = vmatpush.bf16.msra.mxu0 %v1217
        %1255 = vmatpush.bf16.msra.mxu0 %v1215
        %1256 = vmatpush.bf16.msra.mxu0 %v1213
        %1257 = vmatpush.bf16.msra.mxu0 %v1211
        %1258 = vmatpush.bf16.msra.mxu0 %v1209
        %1259 = vmatpush.bf16.msra.mxu0 %v1207
        %1260 = vmatmul.bf16.gmra.mxu0 %v1248
        %v1261 = vpop.f32.mrf.mxu0
        %v1262 = vadd.f32 %v1243, %v1261
        %v1263 = vpop.f32.mrf.mxu0
        %1264 = vdwg.mxu0
        %1265 = vmatpush.bf16.msra.mxu0 %v1237
        %1266 = vmatpush.bf16.msra.mxu0 %v1235
        %1267 = vmatpush.bf16.msra.mxu0 %v1233
        %1268 = vmatpush.bf16.msra.mxu0 %v1231
        %1269 = vmatpush.bf16.msra.mxu0 %v1229
        %1270 = vmatpush.bf16.msra.mxu0 %v1227
        %1271 = vmatpush.bf16.msra.mxu0 %v1225
        %1272 = vmatpush.bf16.msra.mxu0 %v1223
        %1273 = vmatmul.bf16.gmra.mxu0 %v1249
        %v1274 = vpop.f32.mrf.mxu0
        %v1275 = vadd.f32 %v1262, %v1274
        %v1276 = vpop.f32.mrf.mxu0
        %1277 = vdwg.mxu0
        %1278 = vmatpush.bf16.msra.mxu0 %v1222
        %1279 = vmatpush.bf16.msra.mxu0 %v1220
        %1280 = vmatpush.bf16.msra.mxu0 %v1218
        %1281 = vmatpush.bf16.msra.mxu0 %v1216
        %1282 = vmatpush.bf16.msra.mxu0 %v1214
        %1283 = vmatpush.bf16.msra.mxu0 %v1212
        %1284 = vmatpush.bf16.msra.mxu0 %v1210
        %1285 = vmatpush.bf16.msra.mxu0 %v1208
        %1286 = vmatmul.bf16.gmra.mxu0 %v1248
        %v1287 = vpop.f32.mrf.mxu0
        %v1288 = vadd.f32 %v1243, %v1287
        %v1289 = vpop.f32.mrf.mxu0
        %1290 = vdwg.mxu0
        %1291 = vmatpush.bf16.msra.mxu0 %v1238
        %1292 = vmatpush.bf16.msra.mxu0 %v1236
        %1293 = vmatpush.bf16.msra.mxu0 %v1234
        %1294 = vmatpush.bf16.msra.mxu0 %v1232
        %1295 = vmatpush.bf16.msra.mxu0 %v1230
        %1296 = vmatpush.bf16.msra.mxu0 %v1228
        %1297 = vmatpush.bf16.msra.mxu0 %v1226
        %1298 = vmatpush.bf16.msra.mxu0 %v1224
        %1299 = vmatmul.bf16.gmra.mxu0 %v1249
        %v1300 = vpop.f32.mrf.mxu0
        %v1301 = vadd.f32 %v1288, %v1300
        %v1302 = vpop.f32.mrf.mxu0
        %1303 = vdwg.mxu0
        %v1304 = vpack.c.bf16 %v1275, %v1275
        %v1305 = vpack.c.bf16 %v1301, %v1301
        %v1306 = vld [vmem:[#allocation3] sm:$0xff]
        %v1307 = vld [vmem:[#allocation3 + $0x8] sm:$0xff]
        %v1308 = vld [vmem:[#allocation3 + $0x10] sm:$0xff]
        %v1309 = vld [vmem:[#allocation3 + $0x18] sm:$0xff]
        %v1310 = vld [vmem:[#allocation3 + $0x20] sm:$0xff]
        %v1311 = vld [vmem:[#allocation3 + $0x28] sm:$0xff]
        %v1312 = vld [vmem:[#allocation3 + $0x30] sm:$0xff]
        %v1313 = vld [vmem:[#allocation3 + $0x38] sm:$0xff]
        %v1314 = vld [vmem:[#allocation3 + $0x40] sm:$0xff]
        %v1315 = vld [vmem:[#allocation3 + $0x48] sm:$0xff]
        %v1316 = vld [vmem:[#allocation3 + $0x50] sm:$0xff]
        %v1317 = vld [vmem:[#allocation3 + $0x58] sm:$0xff]
        %v1318 = vld [vmem:[#allocation3 + $0x60] sm:$0xff]
        %v1319 = vld [vmem:[#allocation3 + $0x68] sm:$0xff]
        %v1320 = vld [vmem:[#allocation3 + $0x70] sm:$0xff]
        %v1321 = vld [vmem:[#allocation3 + $0x78] sm:$0xff]
        %v1322 = vld [vmem:[#allocation3 + $0x80] sm:$0xff]
        %v1323 = vld [vmem:[#allocation3 + $0x88] sm:$0xff]
        %v1324 = vld [vmem:[#allocation3 + $0x90] sm:$0xff]
        %v1325 = vld [vmem:[#allocation3 + $0x98] sm:$0xff]
        %v1326 = vld [vmem:[#allocation3 + $0xa0] sm:$0xff]
        %v1327 = vld [vmem:[#allocation3 + $0xa8] sm:$0xff]
        %v1328 = vld [vmem:[#allocation3 + $0xb0] sm:$0xff]
        %v1329 = vld [vmem:[#allocation3 + $0xb8] sm:$0xff]
        %v1330 = vld [vmem:[#allocation3 + $0xc0] sm:$0xff]
        %v1331 = vld [vmem:[#allocation3 + $0xc8] sm:$0xff]
        %v1332 = vld [vmem:[#allocation3 + $0xd0] sm:$0xff]
        %v1333 = vld [vmem:[#allocation3 + $0xd8] sm:$0xff]
        %v1334 = vld [vmem:[#allocation3 + $0xe0] sm:$0xff]
        %v1335 = vld [vmem:[#allocation3 + $0xe8] sm:$0xff]
        %v1336 = vld [vmem:[#allocation3 + $0xf0] sm:$0xff]
        %v1337 = vld [vmem:[#allocation3 + $0xf8] sm:$0xff]
        %v1338 = vld [vmem:[#allocation3 + $0x100] sm:$0xff]
        %v1339 = vld [vmem:[#allocation3 + $0x108] sm:$0xff]
        %v1340 = vld [vmem:[#allocation3 + $0x110] sm:$0xff]
        %v1341 = vld [vmem:[#allocation3 + $0x118] sm:$0xff]
        %v1342 = vld [vmem:[#allocation3 + $0x120] sm:$0xff]
        %v1343 = vld [vmem:[#allocation3 + $0x128] sm:$0xff]
        %v1344 = vld [vmem:[#allocation3 + $0x130] sm:$0xff]
        %v1345 = vld [vmem:[#allocation3 + $0x138] sm:$0xff]
        %v1346 = vld [vmem:[#allocation3 + $0x140] sm:$0xff]
        %v1347 = vld [vmem:[#allocation3 + $0x148] sm:$0xff]
        %v1348 = vld [vmem:[#allocation3 + $0x150] sm:$0xff]
        %v1349 = vld [vmem:[#allocation3 + $0x158] sm:$0xff]
        %v1350 = vld [vmem:[#allocation3 + $0x160] sm:$0xff]
        %v1351 = vld [vmem:[#allocation3 + $0x168] sm:$0xff]
        %v1352 = vld [vmem:[#allocation3 + $0x170] sm:$0xff]
        %v1353 = vld [vmem:[#allocation3 + $0x178] sm:$0xff]
        %v1354 = vld [vmem:[#allocation3 + $0x180] sm:$0xff]
        %v1355 = vld [vmem:[#allocation3 + $0x188] sm:$0xff]
        %v1356 = vld [vmem:[#allocation3 + $0x190] sm:$0xff]
        %v1357 = vld [vmem:[#allocation3 + $0x198] sm:$0xff]
        %v1358 = vld [vmem:[#allocation3 + $0x1a0] sm:$0xff]
        %v1359 = vld [vmem:[#allocation3 + $0x1a8] sm:$0xff]
        %v1360 = vld [vmem:[#allocation3 + $0x1b0] sm:$0xff]
        %v1361 = vld [vmem:[#allocation3 + $0x1b8] sm:$0xff]
        %v1362 = vld [vmem:[#allocation3 + $0x1c0] sm:$0xff]
        %v1363 = vld [vmem:[#allocation3 + $0x1c8] sm:$0xff]
        %v1364 = vld [vmem:[#allocation3 + $0x1d0] sm:$0xff]
        %v1365 = vld [vmem:[#allocation3 + $0x1d8] sm:$0xff]
        %v1366 = vld [vmem:[#allocation3 + $0x1e0] sm:$0xff]
        %v1367 = vld [vmem:[#allocation3 + $0x1e8] sm:$0xff]
        %v1368 = vld [vmem:[#allocation3 + $0x1f0] sm:$0xff]
        %v1369 = vld [vmem:[#allocation3 + $0x1f8] sm:$0xff]
        %v1370 = vld [vmem:[#allocation3 + $0x200] sm:$0xff]
        %v1371 = vld [vmem:[#allocation3 + $0x208] sm:$0xff]
        %v1372 = vld [vmem:[#allocation3 + $0x210] sm:$0xff]
        %v1373 = vld [vmem:[#allocation3 + $0x218] sm:$0xff]
        %v1374 = vld [vmem:[#allocation3 + $0x220] sm:$0xff]
        %v1375 = vld [vmem:[#allocation3 + $0x228] sm:$0xff]
        %v1376 = vld [vmem:[#allocation3 + $0x230] sm:$0xff]
        %v1377 = vld [vmem:[#allocation3 + $0x238] sm:$0xff]
        %v1378 = vld [vmem:[#allocation3 + $0x240] sm:$0xff]
        %v1379 = vld [vmem:[#allocation3 + $0x248] sm:$0xff]
        %v1380 = vld [vmem:[#allocation3 + $0x250] sm:$0xff]
        %v1381 = vld [vmem:[#allocation3 + $0x258] sm:$0xff]
        %v1382 = vld [vmem:[#allocation3 + $0x260] sm:$0xff]
        %v1383 = vld [vmem:[#allocation3 + $0x268] sm:$0xff]
        %v1384 = vld [vmem:[#allocation3 + $0x270] sm:$0xff]
        %v1385 = vld [vmem:[#allocation3 + $0x278] sm:$0xff]
        %v1386 = vld [vmem:[#allocation3 + $0x280] sm:$0xff]
        %v1387 = vld [vmem:[#allocation3 + $0x288] sm:$0xff]
        %v1388 = vld [vmem:[#allocation3 + $0x290] sm:$0xff]
        %v1389 = vld [vmem:[#allocation3 + $0x298] sm:$0xff]
        %v1390 = vld [vmem:[#allocation3 + $0x2a0] sm:$0xff]
        %v1391 = vld [vmem:[#allocation3 + $0x2a8] sm:$0xff]
        %v1392 = vld [vmem:[#allocation3 + $0x2b0] sm:$0xff]
        %v1393 = vld [vmem:[#allocation3 + $0x2b8] sm:$0xff]
        %v1394 = vld [vmem:[#allocation3 + $0x2c0] sm:$0xff]
        %v1395 = vld [vmem:[#allocation3 + $0x2c8] sm:$0xff]
        %v1396 = vld [vmem:[#allocation3 + $0x2d0] sm:$0xff]
        %v1397 = vld [vmem:[#allocation3 + $0x2d8] sm:$0xff]
        %v1398 = vld [vmem:[#allocation3 + $0x2e0] sm:$0xff]
        %v1399 = vld [vmem:[#allocation3 + $0x2e8] sm:$0xff]
        %v1400 = vld [vmem:[#allocation3 + $0x2f0] sm:$0xff]
        %v1401 = vld [vmem:[#allocation3 + $0x2f8] sm:$0xff]
        %v1402 = vld [vmem:[#allocation3 + $0x300] sm:$0xff]
        %v1403 = vld [vmem:[#allocation3 + $0x308] sm:$0xff]
        %v1404 = vld [vmem:[#allocation3 + $0x310] sm:$0xff]
        %v1405 = vld [vmem:[#allocation3 + $0x318] sm:$0xff]
        %v1406 = vld [vmem:[#allocation3 + $0x320] sm:$0xff]
        %v1407 = vld [vmem:[#allocation3 + $0x328] sm:$0xff]
        %v1408 = vld [vmem:[#allocation3 + $0x330] sm:$0xff]
        %v1409 = vld [vmem:[#allocation3 + $0x338] sm:$0xff]
        %v1410 = vld [vmem:[#allocation3 + $0x340] sm:$0xff]
        %v1411 = vld [vmem:[#allocation3 + $0x348] sm:$0xff]
        %v1412 = vld [vmem:[#allocation3 + $0x350] sm:$0xff]
        %v1413 = vld [vmem:[#allocation3 + $0x358] sm:$0xff]
        %v1414 = vld [vmem:[#allocation3 + $0x360] sm:$0xff]
        %v1415 = vld [vmem:[#allocation3 + $0x368] sm:$0xff]
        %v1416 = vld [vmem:[#allocation3 + $0x370] sm:$0xff]
        %v1417 = vld [vmem:[#allocation3 + $0x378] sm:$0xff]
        %v1418 = vld [vmem:[#allocation3 + $0x380] sm:$0xff]
        %v1419 = vld [vmem:[#allocation3 + $0x388] sm:$0xff]
        %v1420 = vld [vmem:[#allocation3 + $0x390] sm:$0xff]
        %v1421 = vld [vmem:[#allocation3 + $0x398] sm:$0xff]
        %v1422 = vld [vmem:[#allocation3 + $0x3a0] sm:$0xff]
        %v1423 = vld [vmem:[#allocation3 + $0x3a8] sm:$0xff]
        %v1424 = vld [vmem:[#allocation3 + $0x3b0] sm:$0xff]
        %v1425 = vld [vmem:[#allocation3 + $0x3b8] sm:$0xff]
        %v1426 = vld [vmem:[#allocation3 + $0x3c0] sm:$0xff]
        %v1427 = vld [vmem:[#allocation3 + $0x3c8] sm:$0xff]
        %v1428 = vld [vmem:[#allocation3 + $0x3d0] sm:$0xff]
        %v1429 = vld [vmem:[#allocation3 + $0x3d8] sm:$0xff]
        %v1430 = vld [vmem:[#allocation3 + $0x3e0] sm:$0xff]
        %v1431 = vld [vmem:[#allocation3 + $0x3e8] sm:$0xff]
        %v1432 = vld [vmem:[#allocation3 + $0x3f0] sm:$0xff]
        %v1433 = vld [vmem:[#allocation3 + $0x3f8] sm:$0xff]
        %v1562 = vunpack.c.l.b16 %v1306
        %v1563 = vunpack.c.h.b16 %v1306
        %v1564 = vunpack.c.l.b16 %v1307
        %v1565 = vunpack.c.h.b16 %v1307
        %v1566 = vunpack.c.l.b16 %v1308
        %v1567 = vunpack.c.h.b16 %v1308
        %v1568 = vunpack.c.l.b16 %v1309
        %v1569 = vunpack.c.h.b16 %v1309
        %v1570 = vunpack.c.l.b16 %v1310
        %v1571 = vunpack.c.h.b16 %v1310
        %v1572 = vunpack.c.l.b16 %v1311
        %v1573 = vunpack.c.h.b16 %v1311
        %v1574 = vunpack.c.l.b16 %v1312
        %v1575 = vunpack.c.h.b16 %v1312
        %v1576 = vunpack.c.l.b16 %v1313
        %v1577 = vunpack.c.h.b16 %v1313
        %v1578 = vunpack.c.l.b16 %v1314
        %v1579 = vunpack.c.h.b16 %v1314
        %v1580 = vunpack.c.l.b16 %v1315
        %v1581 = vunpack.c.h.b16 %v1315
        %v1582 = vunpack.c.l.b16 %v1316
        %v1583 = vunpack.c.h.b16 %v1316
        %v1584 = vunpack.c.l.b16 %v1317
        %v1585 = vunpack.c.h.b16 %v1317
        %v1586 = vunpack.c.l.b16 %v1318
        %v1587 = vunpack.c.h.b16 %v1318
        %v1588 = vunpack.c.l.b16 %v1319
        %v1589 = vunpack.c.h.b16 %v1319
        %v1590 = vunpack.c.l.b16 %v1320
        %v1591 = vunpack.c.h.b16 %v1320
        %v1592 = vunpack.c.l.b16 %v1321
        %v1593 = vunpack.c.h.b16 %v1321
        %v1594 = vunpack.c.l.b16 %v1322
        %v1595 = vunpack.c.h.b16 %v1322
        %v1596 = vunpack.c.l.b16 %v1323
        %v1597 = vunpack.c.h.b16 %v1323
        %v1598 = vunpack.c.l.b16 %v1324
        %v1599 = vunpack.c.h.b16 %v1324
        %v1600 = vunpack.c.l.b16 %v1325
        %v1601 = vunpack.c.h.b16 %v1325
        %v1602 = vunpack.c.l.b16 %v1326
        %v1603 = vunpack.c.h.b16 %v1326
        %v1604 = vunpack.c.l.b16 %v1327
        %v1605 = vunpack.c.h.b16 %v1327
        %v1606 = vunpack.c.l.b16 %v1328
        %v1607 = vunpack.c.h.b16 %v1328
        %v1608 = vunpack.c.l.b16 %v1329
        %v1609 = vunpack.c.h.b16 %v1329
        %v1610 = vunpack.c.l.b16 %v1330
        %v1611 = vunpack.c.h.b16 %v1330
        %v1612 = vunpack.c.l.b16 %v1331
        %v1613 = vunpack.c.h.b16 %v1331
        %v1614 = vunpack.c.l.b16 %v1332
        %v1615 = vunpack.c.h.b16 %v1332
        %v1616 = vunpack.c.l.b16 %v1333
        %v1617 = vunpack.c.h.b16 %v1333
        %v1618 = vunpack.c.l.b16 %v1334
        %v1619 = vunpack.c.h.b16 %v1334
        %v1620 = vunpack.c.l.b16 %v1335
        %v1621 = vunpack.c.h.b16 %v1335
        %v1622 = vunpack.c.l.b16 %v1336
        %v1623 = vunpack.c.h.b16 %v1336
        %v1624 = vunpack.c.l.b16 %v1337
        %v1625 = vunpack.c.h.b16 %v1337
        %v1626 = vunpack.c.l.b16 %v1338
        %v1627 = vunpack.c.h.b16 %v1338
        %v1628 = vunpack.c.l.b16 %v1339
        %v1629 = vunpack.c.h.b16 %v1339
        %v1630 = vunpack.c.l.b16 %v1340
        %v1631 = vunpack.c.h.b16 %v1340
        %v1632 = vunpack.c.l.b16 %v1341
        %v1633 = vunpack.c.h.b16 %v1341
        %v1634 = vunpack.c.l.b16 %v1342
        %v1635 = vunpack.c.h.b16 %v1342
        %v1636 = vunpack.c.l.b16 %v1343
        %v1637 = vunpack.c.h.b16 %v1343
        %v1638 = vunpack.c.l.b16 %v1344
        %v1639 = vunpack.c.h.b16 %v1344
        %v1640 = vunpack.c.l.b16 %v1345
        %v1641 = vunpack.c.h.b16 %v1345
        %v1642 = vunpack.c.l.b16 %v1346
        %v1643 = vunpack.c.h.b16 %v1346
        %v1644 = vunpack.c.l.b16 %v1347
        %v1645 = vunpack.c.h.b16 %v1347
        %v1646 = vunpack.c.l.b16 %v1348
        %v1647 = vunpack.c.h.b16 %v1348
        %v1648 = vunpack.c.l.b16 %v1349
        %v1649 = vunpack.c.h.b16 %v1349
        %v1650 = vunpack.c.l.b16 %v1350
        %v1651 = vunpack.c.h.b16 %v1350
        %v1652 = vunpack.c.l.b16 %v1351
        %v1653 = vunpack.c.h.b16 %v1351
        %v1654 = vunpack.c.l.b16 %v1352
        %v1655 = vunpack.c.h.b16 %v1352
        %v1656 = vunpack.c.l.b16 %v1353
        %v1657 = vunpack.c.h.b16 %v1353
        %v1658 = vunpack.c.l.b16 %v1354
        %v1659 = vunpack.c.h.b16 %v1354
        %v1660 = vunpack.c.l.b16 %v1355
        %v1661 = vunpack.c.h.b16 %v1355
        %v1662 = vunpack.c.l.b16 %v1356
        %v1663 = vunpack.c.h.b16 %v1356
        %v1664 = vunpack.c.l.b16 %v1357
        %v1665 = vunpack.c.h.b16 %v1357
        %v1666 = vunpack.c.l.b16 %v1358
        %v1667 = vunpack.c.h.b16 %v1358
        %v1668 = vunpack.c.l.b16 %v1359
        %v1669 = vunpack.c.h.b16 %v1359
        %v1670 = vunpack.c.l.b16 %v1360
        %v1671 = vunpack.c.h.b16 %v1360
        %v1672 = vunpack.c.l.b16 %v1361
        %v1673 = vunpack.c.h.b16 %v1361
        %v1674 = vunpack.c.l.b16 %v1362
        %v1675 = vunpack.c.h.b16 %v1362
        %v1676 = vunpack.c.l.b16 %v1363
        %v1677 = vunpack.c.h.b16 %v1363
        %v1678 = vunpack.c.l.b16 %v1364
        %v1679 = vunpack.c.h.b16 %v1364
        %v1680 = vunpack.c.l.b16 %v1365
        %v1681 = vunpack.c.h.b16 %v1365
        %v1682 = vunpack.c.l.b16 %v1366
        %v1683 = vunpack.c.h.b16 %v1366
        %v1684 = vunpack.c.l.b16 %v1367
        %v1685 = vunpack.c.h.b16 %v1367
        %v1686 = vunpack.c.l.b16 %v1368
        %v1687 = vunpack.c.h.b16 %v1368
        %v1688 = vunpack.c.l.b16 %v1369
        %v1689 = vunpack.c.h.b16 %v1369
        %v1690 = vunpack.c.l.b16 %v1370
        %v1691 = vunpack.c.h.b16 %v1370
        %v1692 = vunpack.c.l.b16 %v1371
        %v1693 = vunpack.c.h.b16 %v1371
        %v1694 = vunpack.c.l.b16 %v1372
        %v1695 = vunpack.c.h.b16 %v1372
        %v1696 = vunpack.c.l.b16 %v1373
        %v1697 = vunpack.c.h.b16 %v1373
        %v1698 = vunpack.c.l.b16 %v1374
        %v1699 = vunpack.c.h.b16 %v1374
        %v1700 = vunpack.c.l.b16 %v1375
        %v1701 = vunpack.c.h.b16 %v1375
        %v1702 = vunpack.c.l.b16 %v1376
        %v1703 = vunpack.c.h.b16 %v1376
        %v1704 = vunpack.c.l.b16 %v1377
        %v1705 = vunpack.c.h.b16 %v1377
        %v1706 = vunpack.c.l.b16 %v1378
        %v1707 = vunpack.c.h.b16 %v1378
        %v1708 = vunpack.c.l.b16 %v1379
        %v1709 = vunpack.c.h.b16 %v1379
        %v1710 = vunpack.c.l.b16 %v1380
        %v1711 = vunpack.c.h.b16 %v1380
        %v1712 = vunpack.c.l.b16 %v1381
        %v1713 = vunpack.c.h.b16 %v1381
        %v1714 = vunpack.c.l.b16 %v1382
        %v1715 = vunpack.c.h.b16 %v1382
        %v1716 = vunpack.c.l.b16 %v1383
        %v1717 = vunpack.c.h.b16 %v1383
        %v1718 = vunpack.c.l.b16 %v1384
        %v1719 = vunpack.c.h.b16 %v1384
        %v1720 = vunpack.c.l.b16 %v1385
        %v1721 = vunpack.c.h.b16 %v1385
        %v1722 = vunpack.c.l.b16 %v1386
        %v1723 = vunpack.c.h.b16 %v1386
        %v1724 = vunpack.c.l.b16 %v1387
        %v1725 = vunpack.c.h.b16 %v1387
        %v1726 = vunpack.c.l.b16 %v1388
        %v1727 = vunpack.c.h.b16 %v1388
        %v1728 = vunpack.c.l.b16 %v1389
        %v1729 = vunpack.c.h.b16 %v1389
        %v1730 = vunpack.c.l.b16 %v1390
        %v1731 = vunpack.c.h.b16 %v1390
        %v1732 = vunpack.c.l.b16 %v1391
        %v1733 = vunpack.c.h.b16 %v1391
        %v1734 = vunpack.c.l.b16 %v1392
        %v1735 = vunpack.c.h.b16 %v1392
        %v1736 = vunpack.c.l.b16 %v1393
        %v1737 = vunpack.c.h.b16 %v1393
        %v1738 = vunpack.c.l.b16 %v1394
        %v1739 = vunpack.c.h.b16 %v1394
        %v1740 = vunpack.c.l.b16 %v1395
        %v1741 = vunpack.c.h.b16 %v1395
        %v1742 = vunpack.c.l.b16 %v1396
        %v1743 = vunpack.c.h.b16 %v1396
        %v1744 = vunpack.c.l.b16 %v1397
        %v1745 = vunpack.c.h.b16 %v1397
        %v1746 = vunpack.c.l.b16 %v1398
        %v1747 = vunpack.c.h.b16 %v1398
        %v1748 = vunpack.c.l.b16 %v1399
        %v1749 = vunpack.c.h.b16 %v1399
        %v1750 = vunpack.c.l.b16 %v1400
        %v1751 = vunpack.c.h.b16 %v1400
        %v1752 = vunpack.c.l.b16 %v1401
        %v1753 = vunpack.c.h.b16 %v1401
        %v1754 = vunpack.c.l.b16 %v1402
        %v1755 = vunpack.c.h.b16 %v1402
        %v1756 = vunpack.c.l.b16 %v1403
        %v1757 = vunpack.c.h.b16 %v1403
        %v1758 = vunpack.c.l.b16 %v1404
        %v1759 = vunpack.c.h.b16 %v1404
        %v1760 = vunpack.c.l.b16 %v1405
        %v1761 = vunpack.c.h.b16 %v1405
        %v1762 = vunpack.c.l.b16 %v1406
        %v1763 = vunpack.c.h.b16 %v1406
        %v1764 = vunpack.c.l.b16 %v1407
        %v1765 = vunpack.c.h.b16 %v1407
        %v1766 = vunpack.c.l.b16 %v1408
        %v1767 = vunpack.c.h.b16 %v1408
        %v1768 = vunpack.c.l.b16 %v1409
        %v1769 = vunpack.c.h.b16 %v1409
        %v1770 = vunpack.c.l.b16 %v1410
        %v1771 = vunpack.c.h.b16 %v1410
        %v1772 = vunpack.c.l.b16 %v1411
        %v1773 = vunpack.c.h.b16 %v1411
        %v1774 = vunpack.c.l.b16 %v1412
        %v1775 = vunpack.c.h.b16 %v1412
        %v1776 = vunpack.c.l.b16 %v1413
        %v1777 = vunpack.c.h.b16 %v1413
        %v1778 = vunpack.c.l.b16 %v1414
        %v1779 = vunpack.c.h.b16 %v1414
        %v1780 = vunpack.c.l.b16 %v1415
        %v1781 = vunpack.c.h.b16 %v1415
        %v1782 = vunpack.c.l.b16 %v1416
        %v1783 = vunpack.c.h.b16 %v1416
        %v1784 = vunpack.c.l.b16 %v1417
        %v1785 = vunpack.c.h.b16 %v1417
        %v1786 = vunpack.c.l.b16 %v1418
        %v1787 = vunpack.c.h.b16 %v1418
        %v1788 = vunpack.c.l.b16 %v1419
        %v1789 = vunpack.c.h.b16 %v1419
        %v1790 = vunpack.c.l.b16 %v1420
        %v1791 = vunpack.c.h.b16 %v1420
        %v1792 = vunpack.c.l.b16 %v1421
        %v1793 = vunpack.c.h.b16 %v1421
        %v1794 = vunpack.c.l.b16 %v1422
        %v1795 = vunpack.c.h.b16 %v1422
        %v1796 = vunpack.c.l.b16 %v1423
        %v1797 = vunpack.c.h.b16 %v1423
        %v1798 = vunpack.c.l.b16 %v1424
        %v1799 = vunpack.c.h.b16 %v1424
        %v1800 = vunpack.c.l.b16 %v1425
        %v1801 = vunpack.c.h.b16 %v1425
        %v1802 = vunpack.c.l.b16 %v1426
        %v1803 = vunpack.c.h.b16 %v1426
        %v1804 = vunpack.c.l.b16 %v1427
        %v1805 = vunpack.c.h.b16 %v1427
        %v1806 = vunpack.c.l.b16 %v1428
        %v1807 = vunpack.c.h.b16 %v1428
        %v1808 = vunpack.c.l.b16 %v1429
        %v1809 = vunpack.c.h.b16 %v1429
        %v1810 = vunpack.c.l.b16 %v1430
        %v1811 = vunpack.c.h.b16 %v1430
        %v1812 = vunpack.c.l.b16 %v1431
        %v1813 = vunpack.c.h.b16 %v1431
        %v1814 = vunpack.c.l.b16 %v1432
        %v1815 = vunpack.c.h.b16 %v1432
        %v1816 = vunpack.c.l.b16 %v1433
        %v1817 = vunpack.c.h.b16 %v1433
        %v1818 = vpack.c.b16 %v1570, %v1562
        %v1819 = vpack.c.b16 %v1571, %v1563
        %v1820 = vpack.c.b16 %v1572, %v1564
        %v1821 = vpack.c.b16 %v1573, %v1565
        %v1822 = vpack.c.b16 %v1574, %v1566
        %v1823 = vpack.c.b16 %v1575, %v1567
        %v1824 = vpack.c.b16 %v1576, %v1568
        %v1825 = vpack.c.b16 %v1577, %v1569
        %v1826 = vpack.c.b16 %v1586, %v1578
        %v1827 = vpack.c.b16 %v1587, %v1579
        %v1828 = vpack.c.b16 %v1588, %v1580
        %v1829 = vpack.c.b16 %v1589, %v1581
        %v1830 = vpack.c.b16 %v1590, %v1582
        %v1831 = vpack.c.b16 %v1591, %v1583
        %v1832 = vpack.c.b16 %v1592, %v1584
        %v1833 = vpack.c.b16 %v1593, %v1585
        %v1834 = vpack.c.b16 %v1602, %v1594
        %v1835 = vpack.c.b16 %v1603, %v1595
        %v1836 = vpack.c.b16 %v1604, %v1596
        %v1837 = vpack.c.b16 %v1605, %v1597
        %v1838 = vpack.c.b16 %v1606, %v1598
        %v1839 = vpack.c.b16 %v1607, %v1599
        %v1840 = vpack.c.b16 %v1608, %v1600
        %v1841 = vpack.c.b16 %v1609, %v1601
        %v1842 = vpack.c.b16 %v1618, %v1610
        %v1843 = vpack.c.b16 %v1619, %v1611
        %v1844 = vpack.c.b16 %v1620, %v1612
        %v1845 = vpack.c.b16 %v1621, %v1613
        %v1846 = vpack.c.b16 %v1622, %v1614
        %v1847 = vpack.c.b16 %v1623, %v1615
        %v1848 = vpack.c.b16 %v1624, %v1616
        %v1849 = vpack.c.b16 %v1625, %v1617
        %v1850 = vpack.c.b16 %v1634, %v1626
        %v1851 = vpack.c.b16 %v1635, %v1627
        %v1852 = vpack.c.b16 %v1636, %v1628
        %v1853 = vpack.c.b16 %v1637, %v1629
        %v1854 = vpack.c.b16 %v1638, %v1630
        %v1855 = vpack.c.b16 %v1639, %v1631
        %v1856 = vpack.c.b16 %v1640, %v1632
        %v1857 = vpack.c.b16 %v1641, %v1633
        %v1858 = vpack.c.b16 %v1650, %v1642
        %v1859 = vpack.c.b16 %v1651, %v1643
        %v1860 = vpack.c.b16 %v1652, %v1644
        %v1861 = vpack.c.b16 %v1653, %v1645
        %v1862 = vpack.c.b16 %v1654, %v1646
        %v1863 = vpack.c.b16 %v1655, %v1647
        %v1864 = vpack.c.b16 %v1656, %v1648
        %v1865 = vpack.c.b16 %v1657, %v1649
        %v1866 = vpack.c.b16 %v1666, %v1658
        %v1867 = vpack.c.b16 %v1667, %v1659
        %v1868 = vpack.c.b16 %v1668, %v1660
        %v1869 = vpack.c.b16 %v1669, %v1661
        %v1870 = vpack.c.b16 %v1670, %v1662
        %v1871 = vpack.c.b16 %v1671, %v1663
        %v1872 = vpack.c.b16 %v1672, %v1664
        %v1873 = vpack.c.b16 %v1673, %v1665
        %v1874 = vpack.c.b16 %v1682, %v1674
        %v1875 = vpack.c.b16 %v1683, %v1675
        %v1876 = vpack.c.b16 %v1684, %v1676
        %v1877 = vpack.c.b16 %v1685, %v1677
        %v1878 = vpack.c.b16 %v1686, %v1678
        %v1879 = vpack.c.b16 %v1687, %v1679
        %v1880 = vpack.c.b16 %v1688, %v1680
        %v1881 = vpack.c.b16 %v1689, %v1681
        %v1882 = vpack.c.b16 %v1698, %v1690
        %v1883 = vpack.c.b16 %v1699, %v1691
        %v1884 = vpack.c.b16 %v1700, %v1692
        %v1885 = vpack.c.b16 %v1701, %v1693
        %v1886 = vpack.c.b16 %v1702, %v1694
        %v1887 = vpack.c.b16 %v1703, %v1695
        %v1888 = vpack.c.b16 %v1704, %v1696
        %v1889 = vpack.c.b16 %v1705, %v1697
        %v1890 = vpack.c.b16 %v1714, %v1706
        %v1891 = vpack.c.b16 %v1715, %v1707
        %v1892 = vpack.c.b16 %v1716, %v1708
        %v1893 = vpack.c.b16 %v1717, %v1709
        %v1894 = vpack.c.b16 %v1718, %v1710
        %v1895 = vpack.c.b16 %v1719, %v1711
        %v1896 = vpack.c.b16 %v1720, %v1712
        %v1897 = vpack.c.b16 %v1721, %v1713
        %v1898 = vpack.c.b16 %v1730, %v1722
        %v1899 = vpack.c.b16 %v1731, %v1723
        %v1900 = vpack.c.b16 %v1732, %v1724
        %v1901 = vpack.c.b16 %v1733, %v1725
        %v1902 = vpack.c.b16 %v1734, %v1726
        %v1903 = vpack.c.b16 %v1735, %v1727
        %v1904 = vpack.c.b16 %v1736, %v1728
        %v1905 = vpack.c.b16 %v1737, %v1729
        %v1906 = vpack.c.b16 %v1746, %v1738
        %v1907 = vpack.c.b16 %v1747, %v1739
        %v1908 = vpack.c.b16 %v1748, %v1740
        %v1909 = vpack.c.b16 %v1749, %v1741
        %v1910 = vpack.c.b16 %v1750, %v1742
        %v1911 = vpack.c.b16 %v1751, %v1743
        %v1912 = vpack.c.b16 %v1752, %v1744
        %v1913 = vpack.c.b16 %v1753, %v1745
        %v1914 = vpack.c.b16 %v1762, %v1754
        %v1915 = vpack.c.b16 %v1763, %v1755
        %v1916 = vpack.c.b16 %v1764, %v1756
        %v1917 = vpack.c.b16 %v1765, %v1757
        %v1918 = vpack.c.b16 %v1766, %v1758
        %v1919 = vpack.c.b16 %v1767, %v1759
        %v1920 = vpack.c.b16 %v1768, %v1760
        %v1921 = vpack.c.b16 %v1769, %v1761
        %v1922 = vpack.c.b16 %v1778, %v1770
        %v1923 = vpack.c.b16 %v1779, %v1771
        %v1924 = vpack.c.b16 %v1780, %v1772
        %v1925 = vpack.c.b16 %v1781, %v1773
        %v1926 = vpack.c.b16 %v1782, %v1774
        %v1927 = vpack.c.b16 %v1783, %v1775
        %v1928 = vpack.c.b16 %v1784, %v1776
        %v1929 = vpack.c.b16 %v1785, %v1777
        %v1930 = vpack.c.b16 %v1794, %v1786
        %v1931 = vpack.c.b16 %v1795, %v1787
        %v1932 = vpack.c.b16 %v1796, %v1788
        %v1933 = vpack.c.b16 %v1797, %v1789
        %v1934 = vpack.c.b16 %v1798, %v1790
        %v1935 = vpack.c.b16 %v1799, %v1791
        %v1936 = vpack.c.b16 %v1800, %v1792
        %v1937 = vpack.c.b16 %v1801, %v1793
        %v1938 = vpack.c.b16 %v1810, %v1802
        %v1939 = vpack.c.b16 %v1811, %v1803
        %v1940 = vpack.c.b16 %v1812, %v1804
        %v1941 = vpack.c.b16 %v1813, %v1805
        %v1942 = vpack.c.b16 %v1814, %v1806
        %v1943 = vpack.c.b16 %v1815, %v1807
        %v1944 = vpack.c.b16 %v1816, %v1808
        %v1945 = vpack.c.b16 %v1817, %v1809
        %2074 = vmatpush.bf16.msra.mxu0 %v1874
        %2075 = vmatpush.bf16.msra.mxu0 %v1866
        %2076 = vmatpush.bf16.msra.mxu0 %v1858
        %2077 = vmatpush.bf16.msra.mxu0 %v1850
        %2078 = vmatpush.bf16.msra.mxu0 %v1842
        %2079 = vmatpush.bf16.msra.mxu0 %v1834
        %2080 = vmatpush.bf16.msra.mxu0 %v1826
        %2081 = vmatpush.bf16.msra.mxu0 %v1818
        %2082 = vmatmul.bf16.gmra.mxu0 %v1304
        %v2083 = vpop.f32.mrf.mxu0
        %v2084 = vadd.f32 0.0, %v2083
        %v2085 = vpop.f32.mrf.mxu0
        %2086 = vdwg.mxu0
        %2087 = vmatpush.bf16.msra.mxu0 %v1938
        %2088 = vmatpush.bf16.msra.mxu0 %v1930
        %2089 = vmatpush.bf16.msra.mxu0 %v1922
        %2090 = vmatpush.bf16.msra.mxu0 %v1914
        %2091 = vmatpush.bf16.msra.mxu0 %v1906
        %2092 = vmatpush.bf16.msra.mxu0 %v1898
        %2093 = vmatpush.bf16.msra.mxu0 %v1890
        %2094 = vmatpush.bf16.msra.mxu0 %v1882
        %2095 = vmatmul.bf16.gmra.mxu0 %v1305
        %v2096 = vpop.f32.mrf.mxu0
        %v2097 = vadd.f32 %v2084, %v2096
        %v2098 = vpop.f32.mrf.mxu0
        %2099 = vdwg.mxu0
        %2100 = vmatpush.bf16.msra.mxu0 %v1875
        %2101 = vmatpush.bf16.msra.mxu0 %v1867
        %2102 = vmatpush.bf16.msra.mxu0 %v1859
        %2103 = vmatpush.bf16.msra.mxu0 %v1851
        %2104 = vmatpush.bf16.msra.mxu0 %v1843
        %2105 = vmatpush.bf16.msra.mxu0 %v1835
        %2106 = vmatpush.bf16.msra.mxu0 %v1827
        %2107 = vmatpush.bf16.msra.mxu0 %v1819
        %2108 = vmatmul.bf16.gmra.mxu0 %v1304
        %v2109 = vpop.f32.mrf.mxu0
        %v2110 = vadd.f32 0.0, %v2109
        %v2111 = vpop.f32.mrf.mxu0
        %2112 = vdwg.mxu0
        %2113 = vmatpush.bf16.msra.mxu0 %v1939
        %2114 = vmatpush.bf16.msra.mxu0 %v1931
        %2115 = vmatpush.bf16.msra.mxu0 %v1923
        %2116 = vmatpush.bf16.msra.mxu0 %v1915
        %2117 = vmatpush.bf16.msra.mxu0 %v1907
        %2118 = vmatpush.bf16.msra.mxu0 %v1899
        %2119 = vmatpush.bf16.msra.mxu0 %v1891
        %2120 = vmatpush.bf16.msra.mxu0 %v1883
        %2121 = vmatmul.bf16.gmra.mxu0 %v1305
        %v2122 = vpop.f32.mrf.mxu0
        %v2123 = vadd.f32 %v2110, %v2122
        %v2124 = vpop.f32.mrf.mxu0
        %2125 = vdwg.mxu0
        %2126 = vmatpush.bf16.msra.mxu0 %v1876
        %2127 = vmatpush.bf16.msra.mxu0 %v1868
        %2128 = vmatpush.bf16.msra.mxu0 %v1860
        %2129 = vmatpush.bf16.msra.mxu0 %v1852
        %2130 = vmatpush.bf16.msra.mxu0 %v1844
        %2131 = vmatpush.bf16.msra.mxu0 %v1836
        %2132 = vmatpush.bf16.msra.mxu0 %v1828
        %2133 = vmatpush.bf16.msra.mxu0 %v1820
        %2134 = vmatmul.bf16.gmra.mxu0 %v1304
        %v2135 = vpop.f32.mrf.mxu0
        %v2136 = vadd.f32 0.0, %v2135
        %v2137 = vpop.f32.mrf.mxu0
        %2138 = vdwg.mxu0
        %2139 = vmatpush.bf16.msra.mxu0 %v1940
        %2140 = vmatpush.bf16.msra.mxu0 %v1932
        %2141 = vmatpush.bf16.msra.mxu0 %v1924
        %2142 = vmatpush.bf16.msra.mxu0 %v1916
        %2143 = vmatpush.bf16.msra.mxu0 %v1908
        %2144 = vmatpush.bf16.msra.mxu0 %v1900
        %2145 = vmatpush.bf16.msra.mxu0 %v1892
        %2146 = vmatpush.bf16.msra.mxu0 %v1884
        %2147 = vmatmul.bf16.gmra.mxu0 %v1305
        %v2148 = vpop.f32.mrf.mxu0
        %v2149 = vadd.f32 %v2136, %v2148
        %v2150 = vpop.f32.mrf.mxu0
        %2151 = vdwg.mxu0
        %2152 = vmatpush.bf16.msra.mxu0 %v1877
        %2153 = vmatpush.bf16.msra.mxu0 %v1869
        %2154 = vmatpush.bf16.msra.mxu0 %v1861
        %2155 = vmatpush.bf16.msra.mxu0 %v1853
        %2156 = vmatpush.bf16.msra.mxu0 %v1845
        %2157 = vmatpush.bf16.msra.mxu0 %v1837
        %2158 = vmatpush.bf16.msra.mxu0 %v1829
        %2159 = vmatpush.bf16.msra.mxu0 %v1821
        %2160 = vmatmul.bf16.gmra.mxu0 %v1304
        %v2161 = vpop.f32.mrf.mxu0
        %v2162 = vadd.f32 0.0, %v2161
        %v2163 = vpop.f32.mrf.mxu0
        %2164 = vdwg.mxu0
        %2165 = vmatpush.bf16.msra.mxu0 %v1941
        %2166 = vmatpush.bf16.msra.mxu0 %v1933
        %2167 = vmatpush.bf16.msra.mxu0 %v1925
        %2168 = vmatpush.bf16.msra.mxu0 %v1917
        %2169 = vmatpush.bf16.msra.mxu0 %v1909
        %2170 = vmatpush.bf16.msra.mxu0 %v1901
        %2171 = vmatpush.bf16.msra.mxu0 %v1893
        %2172 = vmatpush.bf16.msra.mxu0 %v1885
        %2173 = vmatmul.bf16.gmra.mxu0 %v1305
        %v2174 = vpop.f32.mrf.mxu0
        %v2175 = vadd.f32 %v2162, %v2174
        %v2176 = vpop.f32.mrf.mxu0
        %2177 = vdwg.mxu0
        %2178 = vmatpush.bf16.msra.mxu0 %v1878
        %2179 = vmatpush.bf16.msra.mxu0 %v1870
        %2180 = vmatpush.bf16.msra.mxu0 %v1862
        %2181 = vmatpush.bf16.msra.mxu0 %v1854
        %2182 = vmatpush.bf16.msra.mxu0 %v1846
        %2183 = vmatpush.bf16.msra.mxu0 %v1838
        %2184 = vmatpush.bf16.msra.mxu0 %v1830
        %2185 = vmatpush.bf16.msra.mxu0 %v1822
        %2186 = vmatmul.bf16.gmra.mxu0 %v1304
        %v2187 = vpop.f32.mrf.mxu0
        %v2188 = vadd.f32 0.0, %v2187
        %v2189 = vpop.f32.mrf.mxu0
        %2190 = vdwg.mxu0
        %2191 = vmatpush.bf16.msra.mxu0 %v1942
        %2192 = vmatpush.bf16.msra.mxu0 %v1934
        %2193 = vmatpush.bf16.msra.mxu0 %v1926
        %2194 = vmatpush.bf16.msra.mxu0 %v1918
        %2195 = vmatpush.bf16.msra.mxu0 %v1910
        %2196 = vmatpush.bf16.msra.mxu0 %v1902
        %2197 = vmatpush.bf16.msra.mxu0 %v1894
        %2198 = vmatpush.bf16.msra.mxu0 %v1886
        %2199 = vmatmul.bf16.gmra.mxu0 %v1305
        %v2200 = vpop.f32.mrf.mxu0
        %v2201 = vadd.f32 %v2188, %v2200
        %v2202 = vpop.f32.mrf.mxu0
        %2203 = vdwg.mxu0
        %2204 = vmatpush.bf16.msra.mxu0 %v1879
        %2205 = vmatpush.bf16.msra.mxu0 %v1871
        %2206 = vmatpush.bf16.msra.mxu0 %v1863
        %2207 = vmatpush.bf16.msra.mxu0 %v1855
        %2208 = vmatpush.bf16.msra.mxu0 %v1847
        %2209 = vmatpush.bf16.msra.mxu0 %v1839
        %2210 = vmatpush.bf16.msra.mxu0 %v1831
        %2211 = vmatpush.bf16.msra.mxu0 %v1823
        %2212 = vmatmul.bf16.gmra.mxu0 %v1304
        %v2213 = vpop.f32.mrf.mxu0
        %v2214 = vadd.f32 0.0, %v2213
        %v2215 = vpop.f32.mrf.mxu0
        %2216 = vdwg.mxu0
        %2217 = vmatpush.bf16.msra.mxu0 %v1943
        %2218 = vmatpush.bf16.msra.mxu0 %v1935
        %2219 = vmatpush.bf16.msra.mxu0 %v1927
        %2220 = vmatpush.bf16.msra.mxu0 %v1919
        %2221 = vmatpush.bf16.msra.mxu0 %v1911
        %2222 = vmatpush.bf16.msra.mxu0 %v1903
        %2223 = vmatpush.bf16.msra.mxu0 %v1895
        %2224 = vmatpush.bf16.msra.mxu0 %v1887
        %2225 = vmatmul.bf16.gmra.mxu0 %v1305
        %v2226 = vpop.f32.mrf.mxu0
        %v2227 = vadd.f32 %v2214, %v2226
        %v2228 = vpop.f32.mrf.mxu0
        %2229 = vdwg.mxu0
        %2230 = vmatpush.bf16.msra.mxu0 %v1880
        %2231 = vmatpush.bf16.msra.mxu0 %v1872
        %2232 = vmatpush.bf16.msra.mxu0 %v1864
        %2233 = vmatpush.bf16.msra.mxu0 %v1856
        %2234 = vmatpush.bf16.msra.mxu0 %v1848
        %2235 = vmatpush.bf16.msra.mxu0 %v1840
        %2236 = vmatpush.bf16.msra.mxu0 %v1832
        %2237 = vmatpush.bf16.msra.mxu0 %v1824
        %2238 = vmatmul.bf16.gmra.mxu0 %v1304
        %v2239 = vpop.f32.mrf.mxu0
        %v2240 = vadd.f32 0.0, %v2239
        %v2241 = vpop.f32.mrf.mxu0
        %2242 = vdwg.mxu0
        %2243 = vmatpush.bf16.msra.mxu0 %v1944
        %2244 = vmatpush.bf16.msra.mxu0 %v1936
        %2245 = vmatpush.bf16.msra.mxu0 %v1928
        %2246 = vmatpush.bf16.msra.mxu0 %v1920
        %2247 = vmatpush.bf16.msra.mxu0 %v1912
        %2248 = vmatpush.bf16.msra.mxu0 %v1904
        %2249 = vmatpush.bf16.msra.mxu0 %v1896
        %2250 = vmatpush.bf16.msra.mxu0 %v1888
        %2251 = vmatmul.bf16.gmra.mxu0 %v1305
        %v2252 = vpop.f32.mrf.mxu0
        %v2253 = vadd.f32 %v2240, %v2252
        %v2254 = vpop.f32.mrf.mxu0
        %2255 = vdwg.mxu0
        %2256 = vmatpush.bf16.msra.mxu0 %v1881
        %2257 = vmatpush.bf16.msra.mxu0 %v1873
        %2258 = vmatpush.bf16.msra.mxu0 %v1865
        %2259 = vmatpush.bf16.msra.mxu0 %v1857
        %2260 = vmatpush.bf16.msra.mxu0 %v1849
        %2261 = vmatpush.bf16.msra.mxu0 %v1841
        %2262 = vmatpush.bf16.msra.mxu0 %v1833
        %2263 = vmatpush.bf16.msra.mxu0 %v1825
        %2264 = vmatmul.bf16.gmra.mxu0 %v1304
        %v2265 = vpop.f32.mrf.mxu0
        %v2266 = vadd.f32 0.0, %v2265
        %v2267 = vpop.f32.mrf.mxu0
        %2268 = vdwg.mxu0
        %2269 = vmatpush.bf16.msra.mxu0 %v1945
        %2270 = vmatpush.bf16.msra.mxu0 %v1937
        %2271 = vmatpush.bf16.msra.mxu0 %v1929
        %2272 = vmatpush.bf16.msra.mxu0 %v1921
        %2273 = vmatpush.bf16.msra.mxu0 %v1913
        %2274 = vmatpush.bf16.msra.mxu0 %v1905
        %2275 = vmatpush.bf16.msra.mxu0 %v1897
        %2276 = vmatpush.bf16.msra.mxu0 %v1889
        %2277 = vmatmul.bf16.gmra.mxu0 %v1305
        %v2278 = vpop.f32.mrf.mxu0
        %v2279 = vadd.f32 %v2266, %v2278
        %v2280 = vpop.f32.mrf.mxu0
        %2281 = vdwg.mxu0
        %2282 = vst [vmem:[%s288] sm:$0xff] %v2097
        %2283 = vst [vmem:[%s288 + $0x8] sm:$0xff] %v2123
        %2284 = vst [vmem:[%s288 + $0x10] sm:$0xff] %v2149
        %2285 = vst [vmem:[%s288 + $0x18] sm:$0xff] %v2175
        %2286 = vst [vmem:[%s288 + $0x20] sm:$0xff] %v2201
        %2287 = vst [vmem:[%s288 + $0x28] sm:$0xff] %v2227
        %2288 = vst [vmem:[%s288 + $0x30] sm:$0xff] %v2253
        %2289 = vst [vmem:[%s288 + $0x38] sm:$0xff] %v2279
        %s2290 = sand.u32 %s182, 1
        %s2291 = scalar_lea.sflag [#allocation5], %s2290
        %s2292 = sand.u32 %s182, 1
        %s2293 = smul.addr %s2292, 64
        %s2294 = scalar_lea.vmem [#allocation6], %s2293
        // Predicated region
        $region53: #{tpu_custom_call.1} parent=47 // pred_check
          %p2295 = pneg %p192
        $region54: #{tpu_custom_call.1} parent=47 // pred_check_branch
          %2297 = sbr.rel (%p2295) target = $region56
        $region55: #{tpu_custom_call.1} parent=47 // pred_region
          %2299 = vsyncadd %s2291, 0
          %s2300 = smul.addr %s22, 8
          %s2301 = smul.addr %s2300, 8
          %s2302 = scalar_lea.hbm %s7, %s2301
          %s2304 = sshll.u32 %s2294, 4
          %s2305 = int_to_ptr.vmem [resolvable:$true] %s2304
          %s2306 = sshll.u32 %s2302, 4
          %s2307 = int_to_ptr.hbm [resolvable:$true] %s2306
          %2309 = dma.vmem_to_hbm [thread:$0]  %s2305, 1024, %s2307, %s2291
        $region56: #{tpu_custom_call.1} parent=47 // pred_fallthru
          _
      $region48: #{tpu_custom_call.1} parent=5 // pred_fallthru
        _
      %p2310 = scmp.le.s32.totalorder 2, %s17
      // Predicated region
      $region57: #{tpu_custom_call.1} parent=5 // pred_check
        %p2311 = pneg %p2310
      $region58: #{tpu_custom_call.1} parent=5 // pred_check_branch
        %2313 = sbr.rel (%p2311) target = $region60
      $region59: #{tpu_custom_call.1} parent=5 // pred_region
        %s2314 = ssub.s32 %s17, 2
        // Predicated region
        $region61: #{tpu_custom_call.1} parent=59 // pred_check
          %p2315 = pneg %p198
        $region62: #{tpu_custom_call.1} parent=59 // pred_check_branch
          %2317 = sbr.rel (%p2315) target = $region64
        $region63: #{tpu_custom_call.1} parent=59 // pred_region
          %s2318 = sand.u32 %s183, 1
          %s2319 = scalar_lea.sflag [#allocation5], %s2318
          %s2320 = sand.u32 %s183, 1
          %s2321 = smul.addr %s2320, 64
          %s2322 = scalar_lea.vmem [#allocation6], %s2321
          %2324 = dma.done %s2319, 1024
        $region64: #{tpu_custom_call.1} parent=59 // pred_fallthru
          _
      $region60: #{tpu_custom_call.1} parent=5 // pred_fallthru
        _
    $region6: #{tpu_custom_call.1} parent=1 // loop_footer
      %s21 = sadd.s32 1, %s17
    $region7: #{tpu_custom_call.1} parent=1 // loop_footer_branch
      %16 = sbr.rel target = $region3
    $region8: #{tpu_custom_call.1} parent=1 // loop_exit
      _
    %2325 = vsyncpa [#allocation4], 1
    %s2326 = scalar_lea.sflag [#allocation4], 1
    %2327 = vsyncpa %s2326, 1
    %2328 = vsyncpa [#allocation5], 1
    %s2329 = scalar_lea.sflag [#allocation5], 1
    %2330 = vsyncpa %s2329, 1

</llo_original>
